<compile_context>
chip_gen: v6e
topology: v6e:2x2x1
jax: 0.10.0
libtpu: 0.0.40
codegen_flags: <defaults>
</compile_context>

<pallas_src>
import jax
import jax.numpy as jnp
from jax.experimental import pallas as pl
from jax.experimental.pallas import tpu as pltpu

# Layer sizes from the PyTorch module: n_inputs -> 57 -> 22 -> 107 -> 202 -> 162 -> 1
LAYER_SIZES = [57, 22, 107, 202, 162, 1]


def _round_up(x, m):
    return (x + m - 1) // m * m


# ---------------------------------------------------------------------------
# Kernel
# ---------------------------------------------------------------------------
def mlp_kernel(x_ref,
               w1, b1, w2, b2, w3, b3, w4, b4, w5, b5, w6, b6,
               o_ref):
    """One batch tile: x_ref (bt, n_in) f32 -> o_ref (1, bt) f32 lane-dense logits."""

    def dense_bf16(h, w_ref, b_ref):
        # bf16 MXU operands, f32 accumulation, f32 bias add.
        return jnp.dot(h.astype(jnp.bfloat16), w_ref[...],
                       preferred_element_type=jnp.float32) + b_ref[...]

    def sigmoid(z):
        # tanh form: one EUP op + cheap VALU FMA; exact (no approx reciprocal).
        return 0.5 * jnp.tanh(0.5 * z) + 0.5

    # Layer 1 fully in f32 (raw tabular features, tiny K).
    x = x_ref[...]                                                    # (bt, n_in)
    h = jnp.maximum(jnp.dot(x, w1[...], preferred_element_type=jnp.float32)
                    + b1[...], 0.0)                                   # (bt, 128)
    h = jnp.maximum(dense_bf16(h, w2, b2), 0.0)                       # (bt, 128)
    h = jnp.maximum(dense_bf16(h, w3, b3), 0.0)                       # (bt, 128)
    h = sigmoid(dense_bf16(h, w4, b4))                                # (bt, 256)
    h = sigmoid(dense_bf16(h, w5, b5))                                # (bt, 256)
    z = dense_bf16(h, w6, b6)                                         # (bt, 128); col 0 = logit

    # Lane-dense repack: transpose (XLU, free slot) so the bt logits lie along the
    # 128-lane axis; apply the last sigmoid only to the real logits.
    zt = jnp.transpose(z)                                             # (128, bt)
    o_ref[...] = sigmoid(zt[0:1, :]).astype(o_ref.dtype)              # (1, bt)


# ---------------------------------------------------------------------------
# Weight preparation
# ---------------------------------------------------------------------------
def prepare_params(params):
    """Pad weights/biases so every hidden width is a multiple of 128 lanes.

    * Layer 1 keeps its real contraction dim (n_inputs) and stays f32; only its
      output dim is padded.
    * Layers 2..6: both dims padded to multiples of 128, weights cast to bf16.
    * Padded rows/cols/bias entries are zero so padded activation columns are
      cancelled by the next layer's zero-padded weight rows.
    """
    padded = []
    for li, (w, b) in enumerate(params):
        n_in_l, n_out_l = w.shape
        out_p = _round_up(n_out_l, 128)
        if li == 0:
            in_p, w_dtype = n_in_l, jnp.float32
        else:
            in_p, w_dtype = _round_up(n_in_l, 128), jnp.bfloat16
        wp = jnp.zeros((in_p, out_p), w_dtype)
        wp = wp.at[:n_in_l, :n_out_l].set(w.astype(w_dtype))
        bp = jnp.zeros((1, out_p), jnp.float32)
        bp = bp.at[:, :n_out_l].set(b.reshape(1, -1).astype(jnp.float32))
        padded.append((wp, bp))
    return padded


# ---------------------------------------------------------------------------
# Wrapper
# ---------------------------------------------------------------------------
def fraud_mlp_forward(x, params, *, batch_tile=None, core_parallel=False):
    """x: (B, n_inputs) f32.  params: list of (W (in,out), b (1,out)) f32, unpadded.

    Returns (B, 1) f32 fraud probabilities.
    """
    B, n_in = x.shape
    padded = prepare_params(params)
    assert padded[0][0].shape[0] == n_in

    if batch_tile is None:
        # Big tiles amortize per-grid-step overhead; cap at 1024 to stay far under
        # v5e's 16 MiB scoped-VMEM default with f32 intermediates double-buffered.
        batch_tile = max(128, min(1024, _round_up(B, 128)))
    batch_tile = _round_up(batch_tile, 128)
    B_pad = _round_up(B, batch_tile)
    num_tiles = B_pad // batch_tile

    # No feature-dim pad and no dtype cast: kernel reads the raw features.
    x_in = x.astype(jnp.float32)
    if B_pad != B:
        x_in = jnp.pad(x_in, ((0, B_pad - B), (0, 0)))   # cheap row pad only

    flat_params = []
    param_specs = []
    for (w, b) in padded:
        flat_params += [w, b]
        # Full-array blocks, same block index every grid step: the pipeline does
        # not re-fetch invariant operands after the first iteration.
        param_specs += [
            pl.BlockSpec(w.shape, lambda i: (0, 0)),
            pl.BlockSpec(b.shape, lambda i: (0, 0)),
        ]

    flops = 2 * B_pad * sum(int(w.shape[0]) * int(w.shape[1]) for w, _ in padded)
    transcendentals = B_pad * (int(padded[3][0].shape[1])
                               + int(padded[4][0].shape[1]) + 1)
    bytes_accessed = (x_in.size * 4                         # f32 input
                      + B_pad * 4                           # lane-dense f32 logits
                      + sum(w.size * w.dtype.itemsize + b.size * 4
                            for w, b in padded))
    cost = pl.CostEstimate(flops=flops, transcendentals=transcendentals,
                           bytes_accessed=bytes_accessed)

    # On v7x pass core_parallel=True (and make num_tiles even) so the batch axis is
    # split across both TensorCores; "parallel" is the safe single-TC default.
    semantics = (pltpu.CORE_PARALLEL,) if core_parallel else ("parallel",)

    out = pl.pallas_call(
        mlp_kernel,
        out_shape=jax.ShapeDtypeStruct((1, B_pad), jnp.float32),
        grid=(num_tiles,),
        in_specs=[pl.BlockSpec((batch_tile, n_in), lambda i: (i, 0))] + param_specs,
        out_specs=pl.BlockSpec((1, batch_tile), lambda i: (0, i)),
        compiler_params=pltpu.CompilerParams(dimension_semantics=semantics),
        cost_estimate=cost,
    )(x_in, *flat_params)

    # Logits sit lane-dense in row 0; this slice reads only B*4 bytes.
    return out[0, :B].reshape(B, 1)


# ---------------------------------------------------------------------------
# Init + reference
# ---------------------------------------------------------------------------
def init_params(key, n_inputs):
    """Deterministic init matching the PyTorch shapes.

    kaiming_uniform_(relu): U(-sqrt(6/fan_in), sqrt(6/fan_in))
    xavier_uniform_:        U(-sqrt(6/(fan_in+fan_out)), ...)
    Linear bias default:    U(-1/sqrt(fan_in), 1/sqrt(fan_in))
    Weights are returned already transposed to (in, out).
    """
    params = []
    fan_in = n_inputs
    for li, fan_out in enumerate(LAYER_SIZES):
        key, kw, kb = jax.random.split(key, 3)
        if li == len(LAYER_SIZES) - 1:      # hidden6: xavier_uniform_
            bound_w = (6.0 / (fan_in + fan_out)) ** 0.5
        else:                               # kaiming_uniform_ (relu)
            bound_w = (6.0 / fan_in) ** 0.5
        w = jax.random.uniform(kw, (fan_in, fan_out), jnp.float32,
                               minval=-bound_w, maxval=bound_w)
        bound_b = 1.0 / (fan_in ** 0.5)
        b = jax.random.uniform(kb, (1, fan_out), jnp.float32,
                               minval=-bound_b, maxval=bound_b)
        params.append((w, b))
        fan_in = fan_out
    return params


def reference_forward(x, params):
    h = x
    for li, (w, b) in enumerate(params):
        h = h @ w + b
        if li < 3:
            h = jnp.maximum(h, 0.0)
        else:
            h = jax.nn.sigmoid(h)
    return h


if __name__ == "__main__":
    key = jax.random.PRNGKey(0)
    n_inputs = 30   # number of tabular fraud features
    batch = 200     # deliberately not a multiple of the tile; wrapper row-pads

    key, kx = jax.random.split(key)
    x = jax.random.normal(kx, (batch, n_inputs), jnp.float32)
    params = init_params(key, n_inputs)

    out = fraud_mlp_forward(x, params, batch_tile=128)   # grid = (2,)
    out = jax.block_until_ready(out)

    ref = reference_forward(x, params)
    assert out.shape == (batch, 1)
    max_err = float(jnp.max(jnp.abs(out - ref)))
    # bf16 MXU operands in layers 2..6 give a small deviation from the f32
    # reference; outputs are sigmoid-bounded in [0, 1].
    assert max_err < 2e-2, max_err

    print("KERNEL_OK")
</pallas_src>

<mosaic_0001>
module attributes {stable_mosaic.version = 11 : i64} {
  func.func @mlp_kernel(%arg0: i32, %arg1: memref<128x30xf32, #tpu.memory_space<vmem>>, %arg2: memref<30x128xf32, #tpu.memory_space<vmem>>, %arg3: memref<1x128xf32, #tpu.memory_space<vmem>>, %arg4: memref<128x128xbf16, #tpu.memory_space<vmem>>, %arg5: memref<1x128xf32, #tpu.memory_space<vmem>>, %arg6: memref<128x128xbf16, #tpu.memory_space<vmem>>, %arg7: memref<1x128xf32, #tpu.memory_space<vmem>>, %arg8: memref<128x256xbf16, #tpu.memory_space<vmem>>, %arg9: memref<1x256xf32, #tpu.memory_space<vmem>>, %arg10: memref<256x256xbf16, #tpu.memory_space<vmem>>, %arg11: memref<1x256xf32, #tpu.memory_space<vmem>>, %arg12: memref<256x128xbf16, #tpu.memory_space<vmem>>, %arg13: memref<1x128xf32, #tpu.memory_space<vmem>>, %arg14: memref<1x128xf32, #tpu.memory_space<vmem>>) attributes {dimension_semantics = [#tpu.dimension_semantics<parallel>], iteration_bounds = array<i64: 2>, scalar_prefetch = 0 : i64, scratch_operands = 0 : i64, tpu.core_type = #tpu.core_type<tc>, window_params = [{transform_indices = @transform_0, window_bounds = array<i64: 128, 30>}, {pipeline_mode = #tpu.pipeline_mode<synchronous>, transform_indices = @transform_1, window_bounds = array<i64: 30, 128>}, {pipeline_mode = #tpu.pipeline_mode<synchronous>, transform_indices = @transform_2, window_bounds = array<i64: 1, 128>}, {pipeline_mode = #tpu.pipeline_mode<synchronous>, transform_indices = @transform_3, window_bounds = array<i64: 128, 128>}, {pipeline_mode = #tpu.pipeline_mode<synchronous>, transform_indices = @transform_4, window_bounds = array<i64: 1, 128>}, {pipeline_mode = #tpu.pipeline_mode<synchronous>, transform_indices = @transform_5, window_bounds = array<i64: 128, 128>}, {pipeline_mode = #tpu.pipeline_mode<synchronous>, transform_indices = @transform_6, window_bounds = array<i64: 1, 128>}, {pipeline_mode = #tpu.pipeline_mode<synchronous>, transform_indices = @transform_7, window_bounds = array<i64: 128, 256>}, {pipeline_mode = #tpu.pipeline_mode<synchronous>, transform_indices = @transform_8, window_bounds = array<i64: 1, 256>}, {pipeline_mode = #tpu.pipeline_mode<synchronous>, transform_indices = @transform_9, window_bounds = array<i64: 256, 256>}, {pipeline_mode = #tpu.pipeline_mode<synchronous>, transform_indices = @transform_10, window_bounds = array<i64: 1, 256>}, {pipeline_mode = #tpu.pipeline_mode<synchronous>, transform_indices = @transform_11, window_bounds = array<i64: 256, 128>}, {pipeline_mode = #tpu.pipeline_mode<synchronous>, transform_indices = @transform_12, window_bounds = array<i64: 1, 128>}, {transform_indices = @transform_13, window_bounds = array<i64: 1, 128>}]} {
    %c0 = arith.constant 0 : index
    %c0_0 = arith.constant 0 : index
    %0 = vector.load %arg1[%c0, %c0_0] : memref<128x30xf32, #tpu.memory_space<vmem>>, vector<128x30xf32>
    %c0_1 = arith.constant 0 : index
    %c0_2 = arith.constant 0 : index
    %1 = vector.load %arg2[%c0_1, %c0_2] : memref<30x128xf32, #tpu.memory_space<vmem>>, vector<30x128xf32>
    %cst = arith.constant dense<0.000000e+00> : vector<128x128xf32>
    %2 = tpu.matmul %0, %1, %cst {dimension_numbers = #tpu.dot_dimension_numbers<[1], [0], [0], [1], [0, 0, 1, 1], [], []>} : vector<128x30xf32>, vector<30x128xf32>, vector<128x128xf32> -> vector<128x128xf32>
    %c0_3 = arith.constant 0 : index
    %c0_4 = arith.constant 0 : index
    %3 = vector.load %arg3[%c0_3, %c0_4] : memref<1x128xf32, #tpu.memory_space<vmem>>, vector<1x128xf32>
    %4 = vector.broadcast %3 : vector<1x128xf32> to vector<128x128xf32>
    %5 = arith.addf %2, %4 : vector<128x128xf32>
    %cst_5 = arith.constant 0.000000e+00 : f32
    %6 = vector.broadcast %cst_5 : f32 to vector<128x128xf32>
    %7 = arith.maximumf %5, %6 : vector<128x128xf32>
    %8 = arith.truncf %7 : vector<128x128xf32> to vector<128x128xbf16>
    %c0_6 = arith.constant 0 : index
    %c0_7 = arith.constant 0 : index
    %9 = vector.load %arg4[%c0_6, %c0_7] : memref<128x128xbf16, #tpu.memory_space<vmem>>, vector<128x128xbf16>
    %cst_8 = arith.constant dense<0.000000e+00> : vector<128x128xf32>
    %10 = tpu.matmul %8, %9, %cst_8 {dimension_numbers = #tpu.dot_dimension_numbers<[1], [0], [0], [1], [0, 0, 1, 1], [], []>} : vector<128x128xbf16>, vector<128x128xbf16>, vector<128x128xf32> -> vector<128x128xf32>
    %c0_9 = arith.constant 0 : index
    %c0_10 = arith.constant 0 : index
    %11 = vector.load %arg5[%c0_9, %c0_10] : memref<1x128xf32, #tpu.memory_space<vmem>>, vector<1x128xf32>
    %12 = vector.broadcast %11 : vector<1x128xf32> to vector<128x128xf32>
    %13 = arith.addf %10, %12 : vector<128x128xf32>
    %cst_11 = arith.constant 0.000000e+00 : f32
    %14 = vector.broadcast %cst_11 : f32 to vector<128x128xf32>
    %15 = arith.maximumf %13, %14 : vector<128x128xf32>
    %16 = arith.truncf %15 : vector<128x128xf32> to vector<128x128xbf16>
    %c0_12 = arith.constant 0 : index
    %c0_13 = arith.constant 0 : index
    %17 = vector.load %arg6[%c0_12, %c0_13] : memref<128x128xbf16, #tpu.memory_space<vmem>>, vector<128x128xbf16>
    %cst_14 = arith.constant dense<0.000000e+00> : vector<128x128xf32>
    %18 = tpu.matmul %16, %17, %cst_14 {dimension_numbers = #tpu.dot_dimension_numbers<[1], [0], [0], [1], [0, 0, 1, 1], [], []>} : vector<128x128xbf16>, vector<128x128xbf16>, vector<128x128xf32> -> vector<128x128xf32>
    %c0_15 = arith.constant 0 : index
    %c0_16 = arith.constant 0 : index
    %19 = vector.load %arg7[%c0_15, %c0_16] : memref<1x128xf32, #tpu.memory_space<vmem>>, vector<1x128xf32>
    %20 = vector.broadcast %19 : vector<1x128xf32> to vector<128x128xf32>
    %21 = arith.addf %18, %20 : vector<128x128xf32>
    %cst_17 = arith.constant 0.000000e+00 : f32
    %22 = vector.broadcast %cst_17 : f32 to vector<128x128xf32>
    %23 = arith.maximumf %21, %22 : vector<128x128xf32>
    %24 = arith.truncf %23 : vector<128x128xf32> to vector<128x128xbf16>
    %c0_18 = arith.constant 0 : index
    %c0_19 = arith.constant 0 : index
    %25 = vector.load %arg8[%c0_18, %c0_19] : memref<128x256xbf16, #tpu.memory_space<vmem>>, vector<128x256xbf16>
    %cst_20 = arith.constant dense<0.000000e+00> : vector<128x256xf32>
    %26 = tpu.matmul %24, %25, %cst_20 {dimension_numbers = #tpu.dot_dimension_numbers<[1], [0], [0], [1], [0, 0, 1, 1], [], []>} : vector<128x128xbf16>, vector<128x256xbf16>, vector<128x256xf32> -> vector<128x256xf32>
    %c0_21 = arith.constant 0 : index
    %c0_22 = arith.constant 0 : index
    %27 = vector.load %arg9[%c0_21, %c0_22] : memref<1x256xf32, #tpu.memory_space<vmem>>, vector<1x256xf32>
    %28 = vector.broadcast %27 : vector<1x256xf32> to vector<128x256xf32>
    %29 = arith.addf %26, %28 : vector<128x256xf32>
    %cst_23 = arith.constant 5.000000e-01 : f32
    %30 = vector.broadcast %cst_23 : f32 to vector<128x256xf32>
    %31 = arith.mulf %30, %29 : vector<128x256xf32>
    %32 = math.tanh %31 : vector<128x256xf32>
    %cst_24 = arith.constant 5.000000e-01 : f32
    %33 = vector.broadcast %cst_24 : f32 to vector<128x256xf32>
    %34 = arith.mulf %33, %32 : vector<128x256xf32>
    %cst_25 = arith.constant 5.000000e-01 : f32
    %35 = vector.broadcast %cst_25 : f32 to vector<128x256xf32>
    %36 = arith.addf %34, %35 : vector<128x256xf32>
    %37 = arith.truncf %36 : vector<128x256xf32> to vector<128x256xbf16>
    %c0_26 = arith.constant 0 : index
    %c0_27 = arith.constant 0 : index
    %38 = vector.load %arg10[%c0_26, %c0_27] : memref<256x256xbf16, #tpu.memory_space<vmem>>, vector<256x256xbf16>
    %cst_28 = arith.constant dense<0.000000e+00> : vector<128x256xf32>
    %39 = tpu.matmul %37, %38, %cst_28 {dimension_numbers = #tpu.dot_dimension_numbers<[1], [0], [0], [1], [0, 0, 1, 1], [], []>} : vector<128x256xbf16>, vector<256x256xbf16>, vector<128x256xf32> -> vector<128x256xf32>
    %c0_29 = arith.constant 0 : index
    %c0_30 = arith.constant 0 : index
    %40 = vector.load %arg11[%c0_29, %c0_30] : memref<1x256xf32, #tpu.memory_space<vmem>>, vector<1x256xf32>
    %41 = vector.broadcast %40 : vector<1x256xf32> to vector<128x256xf32>
    %42 = arith.addf %39, %41 : vector<128x256xf32>
    %cst_31 = arith.constant 5.000000e-01 : f32
    %43 = vector.broadcast %cst_31 : f32 to vector<128x256xf32>
    %44 = arith.mulf %43, %42 : vector<128x256xf32>
    %45 = math.tanh %44 : vector<128x256xf32>
    %cst_32 = arith.constant 5.000000e-01 : f32
    %46 = vector.broadcast %cst_32 : f32 to vector<128x256xf32>
    %47 = arith.mulf %46, %45 : vector<128x256xf32>
    %cst_33 = arith.constant 5.000000e-01 : f32
    %48 = vector.broadcast %cst_33 : f32 to vector<128x256xf32>
    %49 = arith.addf %47, %48 : vector<128x256xf32>
    %50 = arith.truncf %49 : vector<128x256xf32> to vector<128x256xbf16>
    %c0_34 = arith.constant 0 : index
    %c0_35 = arith.constant 0 : index
    %51 = vector.load %arg12[%c0_34, %c0_35] : memref<256x128xbf16, #tpu.memory_space<vmem>>, vector<256x128xbf16>
    %cst_36 = arith.constant dense<0.000000e+00> : vector<128x128xf32>
    %52 = tpu.matmul %50, %51, %cst_36 {dimension_numbers = #tpu.dot_dimension_numbers<[1], [0], [0], [1], [0, 0, 1, 1], [], []>} : vector<128x256xbf16>, vector<256x128xbf16>, vector<128x128xf32> -> vector<128x128xf32>
    %c0_37 = arith.constant 0 : index
    %c0_38 = arith.constant 0 : index
    %53 = vector.load %arg13[%c0_37, %c0_38] : memref<1x128xf32, #tpu.memory_space<vmem>>, vector<1x128xf32>
    %54 = vector.broadcast %53 : vector<1x128xf32> to vector<128x128xf32>
    %55 = arith.addf %52, %54 : vector<128x128xf32>
    %56 = tpu.transpose %55, [1, 0] : vector<128x128xf32> -> vector<128x128xf32>
    %57 = vector.extract_strided_slice %56 {offsets = [0, 0], sizes = [1, 128], strides = [1, 1]} : vector<128x128xf32> to vector<1x128xf32>
    %cst_39 = arith.constant 5.000000e-01 : f32
    %58 = vector.broadcast %cst_39 : f32 to vector<1x128xf32>
    %59 = arith.mulf %58, %57 : vector<1x128xf32>
    %60 = math.tanh %59 : vector<1x128xf32>
    %cst_40 = arith.constant 5.000000e-01 : f32
    %61 = vector.broadcast %cst_40 : f32 to vector<1x128xf32>
    %62 = arith.mulf %61, %60 : vector<1x128xf32>
    %cst_41 = arith.constant 5.000000e-01 : f32
    %63 = vector.broadcast %cst_41 : f32 to vector<1x128xf32>
    %64 = arith.addf %62, %63 : vector<1x128xf32>
    %c0_42 = arith.constant 0 : index
    %c0_43 = arith.constant 0 : index
    %65 = vector.load %arg14[%c0_42, %c0_43] : memref<1x128xf32, #tpu.memory_space<vmem>>, vector<1x128xf32>
    tpu.vector_store %arg14[%c0_42, %c0_43], %64 {strides = array<i32>} : memref<1x128xf32, #tpu.memory_space<vmem>>, vector<1x128xf32>,
    return
  }
  func.func @transform_0(%arg0: i32) -> (i32, i32) {
    %c0_i32 = arith.constant 0 : i32
    %c0_i32_0 = arith.constant 0 : i32
    return %arg0, %c0_i32 : i32, i32
  }
  func.func @transform_1(%arg0: i32) -> (i32, i32) {
    %c0_i32 = arith.constant 0 : i32
    %c0_i32_0 = arith.constant 0 : i32
    %c0_i32_1 = arith.constant 0 : i32
    return %c0_i32, %c0_i32_0 : i32, i32
  }
  func.func @transform_2(%arg0: i32) -> (i32, i32) {
    %c0_i32 = arith.constant 0 : i32
    %c0_i32_0 = arith.constant 0 : i32
    %c0_i32_1 = arith.constant 0 : i32
    return %c0_i32, %c0_i32_0 : i32, i32
  }
  func.func @transform_3(%arg0: i32) -> (i32, i32) {
    %c0_i32 = arith.constant 0 : i32
    %c0_i32_0 = arith.constant 0 : i32
    %c0_i32_1 = arith.constant 0 : i32
    return %c0_i32, %c0_i32_0 : i32, i32
  }
  func.func @transform_4(%arg0: i32) -> (i32, i32) {
    %c0_i32 = arith.constant 0 : i32
    %c0_i32_0 = arith.constant 0 : i32
    %c0_i32_1 = arith.constant 0 : i32
    return %c0_i32, %c0_i32_0 : i32, i32
  }
  func.func @transform_5(%arg0: i32) -> (i32, i32) {
    %c0_i32 = arith.constant 0 : i32
    %c0_i32_0 = arith.constant 0 : i32
    %c0_i32_1 = arith.constant 0 : i32
    return %c0_i32, %c0_i32_0 : i32, i32
  }
  func.func @transform_6(%arg0: i32) -> (i32, i32) {
    %c0_i32 = arith.constant 0 : i32
    %c0_i32_0 = arith.constant 0 : i32
    %c0_i32_1 = arith.constant 0 : i32
    return %c0_i32, %c0_i32_0 : i32, i32
  }
  func.func @transform_7(%arg0: i32) -> (i32, i32) {
    %c0_i32 = arith.constant 0 : i32
    %c0_i32_0 = arith.constant 0 : i32
    %c0_i32_1 = arith.constant 0 : i32
    return %c0_i32, %c0_i32_0 : i32, i32
  }
  func.func @transform_8(%arg0: i32) -> (i32, i32) {
    %c0_i32 = arith.constant 0 : i32
    %c0_i32_0 = arith.constant 0 : i32
    %c0_i32_1 = arith.constant 0 : i32
    return %c0_i32, %c0_i32_0 : i32, i32
  }
  func.func @transform_9(%arg0: i32) -> (i32, i32) {
    %c0_i32 = arith.constant 0 : i32
    %c0_i32_0 = arith.constant 0 : i32
    %c0_i32_1 = arith.constant 0 : i32
    return %c0_i32, %c0_i32_0 : i32, i32
  }
  func.func @transform_10(%arg0: i32) -> (i32, i32) {
    %c0_i32 = arith.constant 0 : i32
    %c0_i32_0 = arith.constant 0 : i32
    %c0_i32_1 = arith.constant 0 : i32
    return %c0_i32, %c0_i32_0 : i32, i32
  }
  func.func @transform_11(%arg0: i32) -> (i32, i32) {
    %c0_i32 = arith.constant 0 : i32
    %c0_i32_0 = arith.constant 0 : i32
    %c0_i32_1 = arith.constant 0 : i32
    return %c0_i32, %c0_i32_0 : i32, i32
  }
  func.func @transform_12(%arg0: i32) -> (i32, i32) {
    %c0_i32 = arith.constant 0 : i32
    %c0_i32_0 = arith.constant 0 : i32
    %c0_i32_1 = arith.constant 0 : i32
    return %c0_i32, %c0_i32_0 : i32, i32
  }
  func.func @transform_13(%arg0: i32) -> (i32, i32) {
    %c0_i32 = arith.constant 0 : i32
    %c0_i32_0 = arith.constant 0 : i32
    return %c0_i32, %arg0 : i32, i32
  }
}

</mosaic_0001>

<llo_original>
// kernel: tpu_custom_call.1
$region0: #{tpu_custom_call.1}
  #allocation0 [shape = 'u32[]', space=smem, size = 0x4, offset = 0x4, fixed_abs, tag = 'smem constant byte address 0x4 - core index']
  #allocation1 [shape = 'u32[144,128]{1,0:T(1,128)}', space=vmem, size = 0x12000, scoped, tag = 'internal scratch']
  %s0 = inlined_call_operand.vmem [shape: f32[256,30], index: 0, kind: input, shape index: {}]
  %s1 = inlined_call_operand.hbm [shape: f32[30,128], index: 1, kind: input, shape index: {}]
  %s2 = inlined_call_operand.vmem [shape: f32[1,128], index: 2, kind: input, shape index: {}]
  %s3 = inlined_call_operand.vmem [shape: bf16[128,128], index: 3, kind: input, shape index: {}]
  %s4 = inlined_call_operand.vmem [shape: f32[1,128], index: 4, kind: input, shape index: {}]
  %s5 = inlined_call_operand.hbm [shape: bf16[128,128], index: 5, kind: input, shape index: {}]
  %s6 = inlined_call_operand.vmem [shape: f32[1,128], index: 6, kind: input, shape index: {}]
  %s7 = inlined_call_operand.hbm [shape: bf16[128,256], index: 7, kind: input, shape index: {}]
  %s8 = inlined_call_operand.vmem [shape: f32[1,256], index: 8, kind: input, shape index: {}]
  %s9 = inlined_call_operand.vmem [shape: bf16[256,256], index: 9, kind: input, shape index: {}]
  %s10 = inlined_call_operand.vmem [shape: f32[1,256], index: 10, kind: input, shape index: {}]
  %s11 = inlined_call_operand.hbm [shape: bf16[256,128], index: 11, kind: input, shape index: {}]
  %s12 = inlined_call_operand.vmem [shape: f32[1,128], index: 12, kind: input, shape index: {}]
  %s13 = inlined_call_operand.hbm [shape: f32[1,256], index: 13, kind: output, shape index: {}]
  %s14 = sld [smem:[#allocation0]]
  $region101: #{tpu_custom_call.1} parent=0
    _
  %s16 = ssub.s32 1, %s14
  %s17 = scalar_select 0, %s16, %s14
  $region1: #{tpu_custom_call.1} parent=0
    #allocation2 [shape = 'u8[16384]{0}', space=vmem, size = 0x4000, scoped, tag = 'input window, operand 1, single buffered']
    #allocation3 [shape = 's32[2]{0}', space=sflag, size = 0x8, scoped, tag = 'scoped memory for tpu_custom_call.1']
    #allocation4 [shape = 's32[2]{0}', space=sflag, size = 0x8, scoped, tag = 'scoped memory for tpu_custom_call.1']
    #allocation5 [shape = 'u8[32768]{0}', space=vmem, size = 0x8000, scoped, tag = 'input window, operand 5, single buffered']
    #allocation6 [shape = 's32[1]{0}', space=sflag, size = 0x4, scoped, tag = 'scoped memory for tpu_custom_call.1']
    #allocation7 [shape = 'u8[65536]{0}', space=vmem, size = 0x10000, scoped, tag = 'input window, operand 7, single buffered']
    #allocation8 [shape = 'u8[65536]{0}', space=vmem, size = 0x10000, scoped, tag = 'input window, operand 11, single buffered']
    #allocation9 [shape = 's32[1]{0}', space=sflag, size = 0x4, scoped, tag = 'scoped memory for tpu_custom_call.1']
    #allocation10 [shape = 'u8[1024]{0}', space=vmem, size = 0x400, scoped, tag = 'output window, operand 0']
    %18 = vsyncpa [#allocation3], 0
    %19 = vsyncpa [#allocation6], 0
    %20 = vsyncpa [#allocation9], 0
    %21 = vsyncpa [#allocation4], 0
    %s22 = scalar_lea.sflag [#allocation4], 1
    %23 = vsyncpa %s22, 0
    loop: start=0, step=1, limit=4
    $region2: #{tpu_custom_call.1} parent=1 // loop_pre_header
      _
    $region3: #{tpu_custom_call.1} parent=1 // loop_header
      %s25 = sphi 0, %s29
      %p26 = scmp.ge.s32.totalorder %s25, 4
      %s35 = sphi 0, %s37
      %s38 = sphi 0, %s35
      %s39 = sphi 0, %s38
      %s55 = sphi 0, %s39
      %s59 = sphi 0, %s59
      %s61 = sphi 0, %s59
      %s62 = sphi 0, %s61
      %s76 = sphi 0, %s62
      %s80 = sphi 0, %s80
      %s82 = sphi 0, %s80
      %s83 = sphi 0, %s82
      %s97 = sphi 0, %s83
      %s101 = sphi 0, %s101
      %s103 = sphi 0, %s101
      %s104 = sphi 0, %s103
      %s118 = sphi 0, %s104
      %s122 = sphi 0, %s122
      %s124 = sphi 0, %s122
      %s125 = sphi 0, %s124
      %s139 = sphi 0, %s125
      %s143 = sphi 0, %s143
      %s145 = sphi 0, %s143
      %s146 = sphi 0, %s145
      %s160 = sphi 0, %s146
      %s164 = sphi 0, %s164
      %s166 = sphi 0, %s164
      %s167 = sphi 0, %s166
      %s181 = sphi 0, %s167
      %s185 = sphi 0, %s185
      %s187 = sphi 0, %s185
      %s188 = sphi 0, %s187
      %s202 = sphi 0, %s188
      %s206 = sphi 0, %s206
      %s208 = sphi 0, %s206
      %s209 = sphi 0, %s208
      %s223 = sphi 0, %s209
      %s227 = sphi 0, %s227
      %s229 = sphi 0, %s227
      %s230 = sphi 0, %s229
      %s244 = sphi 0, %s230
      %s248 = sphi 0, %s248
      %s250 = sphi 0, %s248
      %s251 = sphi 0, %s250
      %s265 = sphi 0, %s251
      %s269 = sphi 0, %s269
      %s271 = sphi 0, %s269
      %s272 = sphi 0, %s271
      %s286 = sphi 0, %s272
      %s290 = sphi 0, %s290
      %s292 = sphi 0, %s290
      %s293 = sphi 0, %s292
      %s307 = sphi 0, %s293
      %s313 = sphi 0, %s315
      %s316 = sphi 0, %s313
      %s317 = sphi 0, %s316
      %s333 = sphi 0, %s317
    $region4: #{tpu_custom_call.1} parent=1 // loop_header_branch
      %28 = sbr.rel (%p26) target = $region8
    $region5: #{tpu_custom_call.1} parent=1 // loop_body
      %s30 = ssub.s32 %s25, 1
      %s31 = ssub.s32 %s25, 2
      %s32 = sadd.s32 %s25, 1
      %s33 = ssub.s32 %s25, %s32
      %p34 = scmp.eq.s32.totalorder %s33, 0
      %s36 = sadd.s32 %s35, 1
      %s37 = scalar_select %p34, %s35, %s36
      %p40 = pneg %p34
      %p41 = scmp.eq.s32.totalorder %s25, 1
      %p42 = por %p40, %p41
      %p43 = scmp.ne.s32.totalorder %s35, %s38
      %p44 = scmp.eq.s32.totalorder %s25, 0
      %p45 = por %p43, %p44
      %p46 = scmp.ne.s32.totalorder %s35, %s38
      %p47 = scmp.eq.s32.totalorder %s30, 1
      %p48 = por %p46, %p47
      %p49 = scmp.ne.s32.totalorder %s38, %s39
      %p50 = scmp.eq.s32.totalorder %s30, 0
      %p51 = por %p49, %p50
      %p52 = scmp.ne.s32.totalorder %s38, %s39
      %p53 = scmp.eq.s32.totalorder %s31, 1
      %p54 = por %p52, %p53
      %p56 = scmp.ne.s32.totalorder %s39, %s55
      %p57 = scmp.eq.s32.totalorder %s31, 0
      %p58 = por %p56, %p57
      %s60 = sadd.s32 %s59, 1
      %p63 = scmp.eq.s32.totalorder %s25, 1
      %p64 = scmp.ne.s32.totalorder %s59, %s61
      %p65 = scmp.eq.s32.totalorder %s25, 0
      %p66 = por %p64, %p65
      %p67 = scmp.ne.s32.totalorder %s59, %s61
      %p68 = scmp.eq.s32.totalorder %s30, 1
      %p69 = por %p67, %p68
      %p70 = scmp.ne.s32.totalorder %s61, %s62
      %p71 = scmp.eq.s32.totalorder %s30, 0
      %p72 = por %p70, %p71
      %p73 = scmp.ne.s32.totalorder %s61, %s62
      %p74 = scmp.eq.s32.totalorder %s31, 1
      %p75 = por %p73, %p74
      %p77 = scmp.ne.s32.totalorder %s62, %s76
      %p78 = scmp.eq.s32.totalorder %s31, 0
      %p79 = por %p77, %p78
      %s81 = sadd.s32 %s80, 1
      %p84 = scmp.eq.s32.totalorder %s25, 1
      %p85 = scmp.ne.s32.totalorder %s80, %s82
      %p86 = scmp.eq.s32.totalorder %s25, 0
      %p87 = por %p85, %p86
      %p88 = scmp.ne.s32.totalorder %s80, %s82
      %p89 = scmp.eq.s32.totalorder %s30, 1
      %p90 = por %p88, %p89
      %p91 = scmp.ne.s32.totalorder %s82, %s83
      %p92 = scmp.eq.s32.totalorder %s30, 0
      %p93 = por %p91, %p92
      %p94 = scmp.ne.s32.totalorder %s82, %s83
      %p95 = scmp.eq.s32.totalorder %s31, 1
      %p96 = por %p94, %p95
      %p98 = scmp.ne.s32.totalorder %s83, %s97
      %p99 = scmp.eq.s32.totalorder %s31, 0
      %p100 = por %p98, %p99
      %s102 = sadd.s32 %s101, 1
      %p105 = scmp.eq.s32.totalorder %s25, 1
      %p106 = scmp.ne.s32.totalorder %s101, %s103
      %p107 = scmp.eq.s32.totalorder %s25, 0
      %p108 = por %p106, %p107
      %p109 = scmp.ne.s32.totalorder %s101, %s103
      %p110 = scmp.eq.s32.totalorder %s30, 1
      %p111 = por %p109, %p110
      %p112 = scmp.ne.s32.totalorder %s103, %s104
      %p113 = scmp.eq.s32.totalorder %s30, 0
      %p114 = por %p112, %p113
      %p115 = scmp.ne.s32.totalorder %s103, %s104
      %p116 = scmp.eq.s32.totalorder %s31, 1
      %p117 = por %p115, %p116
      %p119 = scmp.ne.s32.totalorder %s104, %s118
      %p120 = scmp.eq.s32.totalorder %s31, 0
      %p121 = por %p119, %p120
      %s123 = sadd.s32 %s122, 1
      %p126 = scmp.eq.s32.totalorder %s25, 1
      %p127 = scmp.ne.s32.totalorder %s122, %s124
      %p128 = scmp.eq.s32.totalorder %s25, 0
      %p129 = por %p127, %p128
      %p130 = scmp.ne.s32.totalorder %s122, %s124
      %p131 = scmp.eq.s32.totalorder %s30, 1
      %p132 = por %p130, %p131
      %p133 = scmp.ne.s32.totalorder %s124, %s125
      %p134 = scmp.eq.s32.totalorder %s30, 0
      %p135 = por %p133, %p134
      %p136 = scmp.ne.s32.totalorder %s124, %s125
      %p137 = scmp.eq.s32.totalorder %s31, 1
      %p138 = por %p136, %p137
      %p140 = scmp.ne.s32.totalorder %s125, %s139
      %p141 = scmp.eq.s32.totalorder %s31, 0
      %p142 = por %p140, %p141
      %s144 = sadd.s32 %s143, 1
      %p147 = scmp.eq.s32.totalorder %s25, 1
      %p148 = scmp.ne.s32.totalorder %s143, %s145
      %p149 = scmp.eq.s32.totalorder %s25, 0
      %p150 = por %p148, %p149
      %p151 = scmp.ne.s32.totalorder %s143, %s145
      %p152 = scmp.eq.s32.totalorder %s30, 1
      %p153 = por %p151, %p152
      %p154 = scmp.ne.s32.totalorder %s145, %s146
      %p155 = scmp.eq.s32.totalorder %s30, 0
      %p156 = por %p154, %p155
      %p157 = scmp.ne.s32.totalorder %s145, %s146
      %p158 = scmp.eq.s32.totalorder %s31, 1
      %p159 = por %p157, %p158
      %p161 = scmp.ne.s32.totalorder %s146, %s160
      %p162 = scmp.eq.s32.totalorder %s31, 0
      %p163 = por %p161, %p162
      %s165 = sadd.s32 %s164, 1
      %p168 = scmp.eq.s32.totalorder %s25, 1
      %p169 = scmp.ne.s32.totalorder %s164, %s166
      %p170 = scmp.eq.s32.totalorder %s25, 0
      %p171 = por %p169, %p170
      %p172 = scmp.ne.s32.totalorder %s164, %s166
      %p173 = scmp.eq.s32.totalorder %s30, 1
      %p174 = por %p172, %p173
      %p175 = scmp.ne.s32.totalorder %s166, %s167
      %p176 = scmp.eq.s32.totalorder %s30, 0
      %p177 = por %p175, %p176
      %p178 = scmp.ne.s32.totalorder %s166, %s167
      %p179 = scmp.eq.s32.totalorder %s31, 1
      %p180 = por %p178, %p179
      %p182 = scmp.ne.s32.totalorder %s167, %s181
      %p183 = scmp.eq.s32.totalorder %s31, 0
      %p184 = por %p182, %p183
      %s186 = sadd.s32 %s185, 1
      %p189 = scmp.eq.s32.totalorder %s25, 1
      %p190 = scmp.ne.s32.totalorder %s185, %s187
      %p191 = scmp.eq.s32.totalorder %s25, 0
      %p192 = por %p190, %p191
      %p193 = scmp.ne.s32.totalorder %s185, %s187
      %p194 = scmp.eq.s32.totalorder %s30, 1
      %p195 = por %p193, %p194
      %p196 = scmp.ne.s32.totalorder %s187, %s188
      %p197 = scmp.eq.s32.totalorder %s30, 0
      %p198 = por %p196, %p197
      %p199 = scmp.ne.s32.totalorder %s187, %s188
      %p200 = scmp.eq.s32.totalorder %s31, 1
      %p201 = por %p199, %p200
      %p203 = scmp.ne.s32.totalorder %s188, %s202
      %p204 = scmp.eq.s32.totalorder %s31, 0
      %p205 = por %p203, %p204
      %s207 = sadd.s32 %s206, 1
      %p210 = scmp.eq.s32.totalorder %s25, 1
      %p211 = scmp.ne.s32.totalorder %s206, %s208
      %p212 = scmp.eq.s32.totalorder %s25, 0
      %p213 = por %p211, %p212
      %p214 = scmp.ne.s32.totalorder %s206, %s208
      %p215 = scmp.eq.s32.totalorder %s30, 1
      %p216 = por %p214, %p215
      %p217 = scmp.ne.s32.totalorder %s208, %s209
      %p218 = scmp.eq.s32.totalorder %s30, 0
      %p219 = por %p217, %p218
      %p220 = scmp.ne.s32.totalorder %s208, %s209
      %p221 = scmp.eq.s32.totalorder %s31, 1
      %p222 = por %p220, %p221
      %p224 = scmp.ne.s32.totalorder %s209, %s223
      %p225 = scmp.eq.s32.totalorder %s31, 0
      %p226 = por %p224, %p225
      %s228 = sadd.s32 %s227, 1
      %p231 = scmp.eq.s32.totalorder %s25, 1
      %p232 = scmp.ne.s32.totalorder %s227, %s229
      %p233 = scmp.eq.s32.totalorder %s25, 0
      %p234 = por %p232, %p233
      %p235 = scmp.ne.s32.totalorder %s227, %s229
      %p236 = scmp.eq.s32.totalorder %s30, 1
      %p237 = por %p235, %p236
      %p238 = scmp.ne.s32.totalorder %s229, %s230
      %p239 = scmp.eq.s32.totalorder %s30, 0
      %p240 = por %p238, %p239
      %p241 = scmp.ne.s32.totalorder %s229, %s230
      %p242 = scmp.eq.s32.totalorder %s31, 1
      %p243 = por %p241, %p242
      %p245 = scmp.ne.s32.totalorder %s230, %s244
      %p246 = scmp.eq.s32.totalorder %s31, 0
      %p247 = por %p245, %p246
      %s249 = sadd.s32 %s248, 1
      %p252 = scmp.eq.s32.totalorder %s25, 1
      %p253 = scmp.ne.s32.totalorder %s248, %s250
      %p254 = scmp.eq.s32.totalorder %s25, 0
      %p255 = por %p253, %p254
      %p256 = scmp.ne.s32.totalorder %s248, %s250
      %p257 = scmp.eq.s32.totalorder %s30, 1
      %p258 = por %p256, %p257
      %p259 = scmp.ne.s32.totalorder %s250, %s251
      %p260 = scmp.eq.s32.totalorder %s30, 0
      %p261 = por %p259, %p260
      %p262 = scmp.ne.s32.totalorder %s250, %s251
      %p263 = scmp.eq.s32.totalorder %s31, 1
      %p264 = por %p262, %p263
      %p266 = scmp.ne.s32.totalorder %s251, %s265
      %p267 = scmp.eq.s32.totalorder %s31, 0
      %p268 = por %p266, %p267
      %s270 = sadd.s32 %s269, 1
      %p273 = scmp.eq.s32.totalorder %s25, 1
      %p274 = scmp.ne.s32.totalorder %s269, %s271
      %p275 = scmp.eq.s32.totalorder %s25, 0
      %p276 = por %p274, %p275
      %p277 = scmp.ne.s32.totalorder %s269, %s271
      %p278 = scmp.eq.s32.totalorder %s30, 1
      %p279 = por %p277, %p278
      %p280 = scmp.ne.s32.totalorder %s271, %s272
      %p281 = scmp.eq.s32.totalorder %s30, 0
      %p282 = por %p280, %p281
      %p283 = scmp.ne.s32.totalorder %s271, %s272
      %p284 = scmp.eq.s32.totalorder %s31, 1
      %p285 = por %p283, %p284
      %p287 = scmp.ne.s32.totalorder %s272, %s286
      %p288 = scmp.eq.s32.totalorder %s31, 0
      %p289 = por %p287, %p288
      %s291 = sadd.s32 %s290, 1
      %p294 = scmp.eq.s32.totalorder %s25, 1
      %p295 = scmp.ne.s32.totalorder %s290, %s292
      %p296 = scmp.eq.s32.totalorder %s25, 0
      %p297 = por %p295, %p296
      %p298 = scmp.ne.s32.totalorder %s290, %s292
      %p299 = scmp.eq.s32.totalorder %s30, 1
      %p300 = por %p298, %p299
      %p301 = scmp.ne.s32.totalorder %s292, %s293
      %p302 = scmp.eq.s32.totalorder %s30, 0
      %p303 = por %p301, %p302
      %p304 = scmp.ne.s32.totalorder %s292, %s293
      %p305 = scmp.eq.s32.totalorder %s31, 1
      %p306 = por %p304, %p305
      %p308 = scmp.ne.s32.totalorder %s293, %s307
      %p309 = scmp.eq.s32.totalorder %s31, 0
      %p310 = por %p308, %p309
      %s311 = ssub.s32 %s25, %s32
      %p312 = scmp.eq.s32.totalorder %s311, 0
      %s314 = sadd.s32 %s313, 1
      %s315 = scalar_select %p312, %s313, %s314
      %p318 = pneg %p312
      %p319 = scmp.eq.s32.totalorder %s25, 1
      %p320 = por %p318, %p319
      %p321 = scmp.ne.s32.totalorder %s313, %s316
      %p322 = scmp.eq.s32.totalorder %s25, 0
      %p323 = por %p321, %p322
      %p324 = scmp.ne.s32.totalorder %s313, %s316
      %p325 = scmp.eq.s32.totalorder %s30, 1
      %p326 = por %p324, %p325
      %p327 = scmp.ne.s32.totalorder %s316, %s317
      %p328 = scmp.eq.s32.totalorder %s30, 0
      %p329 = por %p327, %p328
      %p330 = scmp.ne.s32.totalorder %s316, %s317
      %p331 = scmp.eq.s32.totalorder %s31, 1
      %p332 = por %p330, %p331
      %p334 = scmp.ne.s32.totalorder %s317, %s333
      %p335 = scmp.eq.s32.totalorder %s31, 0
      %p336 = por %p334, %p335
      %p337 = scmp.le.s32.totalorder 1, %s25
      %p338 = scmp.lt.s32.totalorder %s25, 3
      %p339 = pnand %p337, %p338
      %p340 = pneg %p339
      // Predicated region
      $region9: #{tpu_custom_call.1} parent=5 // pred_check
        _
      $region10: #{tpu_custom_call.1} parent=5 // pred_check_branch
        %342 = sbr.rel (%p339) target = $region12
      $region11: #{tpu_custom_call.1} parent=5 // pred_region
        %s343 = ssub.s32 %s25, 1
        // Predicated region
        $region13: #{tpu_custom_call.1} parent=11 // pred_check
          %p344 = pneg %p72
        $region14: #{tpu_custom_call.1} parent=11 // pred_check_branch
          %346 = sbr.rel (%p344) target = $region16
        $region15: #{tpu_custom_call.1} parent=11 // pred_region
          %s348 = ssub.s32 512, 512
          %349 = vsyncadd [#allocation3], %s348
          %s350 = sshll.u32 [#allocation2], 4
          %s351 = int_to_ptr.vmem [resolvable:$true] %s350
          %356 = dma.hbm_to_vmem [thread:$0]  %s1, 512, %s351, [#allocation3], 128, 128, 8
        $region16: #{tpu_custom_call.1} parent=11 // pred_fallthru
          _
        // Predicated region
        $region17: #{tpu_custom_call.1} parent=11 // pred_check
          %p357 = pneg %p93
        $region18: #{tpu_custom_call.1} parent=11 // pred_check_branch
          %359 = sbr.rel (%p357) target = $region20
        $region19: #{tpu_custom_call.1} parent=11 // pred_region
          _
        $region20: #{tpu_custom_call.1} parent=11 // pred_fallthru
          _
        // Predicated region
        $region21: #{tpu_custom_call.1} parent=11 // pred_check
          %p360 = pneg %p114
        $region22: #{tpu_custom_call.1} parent=11 // pred_check_branch
          %362 = sbr.rel (%p360) target = $region24
        $region23: #{tpu_custom_call.1} parent=11 // pred_region
          _
        $region24: #{tpu_custom_call.1} parent=11 // pred_fallthru
          _
        // Predicated region
        $region25: #{tpu_custom_call.1} parent=11 // pred_check
          %p363 = pneg %p135
        $region26: #{tpu_custom_call.1} parent=11 // pred_check_branch
          %365 = sbr.rel (%p363) target = $region28
        $region27: #{tpu_custom_call.1} parent=11 // pred_region
          _
        $region28: #{tpu_custom_call.1} parent=11 // pred_fallthru
          _
        // Predicated region
        $region29: #{tpu_custom_call.1} parent=11 // pred_check
          %p366 = pneg %p156
        $region30: #{tpu_custom_call.1} parent=11 // pred_check_branch
          %368 = sbr.rel (%p366) target = $region32
        $region31: #{tpu_custom_call.1} parent=11 // pred_region
          %s370 = ssub.s32 1024, 1024
          %371 = vsyncadd [#allocation6], %s370
          %s372 = sshll.u32 [#allocation5], 4
          %s373 = int_to_ptr.vmem [resolvable:$true] %s372
          %378 = dma.hbm_to_vmem [thread:$0]  %s5, 1024, %s373, [#allocation6], 64, 64, 4
        $region32: #{tpu_custom_call.1} parent=11 // pred_fallthru
          _
        // Predicated region
        $region33: #{tpu_custom_call.1} parent=11 // pred_check
          %p379 = pneg %p177
        $region34: #{tpu_custom_call.1} parent=11 // pred_check_branch
          %381 = sbr.rel (%p379) target = $region36
        $region35: #{tpu_custom_call.1} parent=11 // pred_region
          _
        $region36: #{tpu_custom_call.1} parent=11 // pred_fallthru
          _
        // Predicated region
        $region37: #{tpu_custom_call.1} parent=11 // pred_check
          %p382 = pneg %p198
        $region38: #{tpu_custom_call.1} parent=11 // pred_check_branch
          %384 = sbr.rel (%p382) target = $region40
        $region39: #{tpu_custom_call.1} parent=11 // pred_region
          %s386 = ssub.s32 2048, 2048
          %387 = vsyncadd [#allocation6], %s386
          %s388 = sshll.u32 [#allocation7], 4
          %s389 = int_to_ptr.vmem [resolvable:$true] %s388
          %394 = dma.hbm_to_vmem [thread:$0]  %s7, 2048, %s389, [#allocation6], 128, 128, 8
        $region40: #{tpu_custom_call.1} parent=11 // pred_fallthru
          _
        // Predicated region
        $region41: #{tpu_custom_call.1} parent=11 // pred_check
          %p395 = pneg %p219
        $region42: #{tpu_custom_call.1} parent=11 // pred_check_branch
          %397 = sbr.rel (%p395) target = $region44
        $region43: #{tpu_custom_call.1} parent=11 // pred_region
          _
        $region44: #{tpu_custom_call.1} parent=11 // pred_fallthru
          _
        // Predicated region
        $region45: #{tpu_custom_call.1} parent=11 // pred_check
          %p398 = pneg %p240
        $region46: #{tpu_custom_call.1} parent=11 // pred_check_branch
          %400 = sbr.rel (%p398) target = $region48
        $region47: #{tpu_custom_call.1} parent=11 // pred_region
          _
        $region48: #{tpu_custom_call.1} parent=11 // pred_fallthru
          _
        // Predicated region
        $region49: #{tpu_custom_call.1} parent=11 // pred_check
          %p401 = pneg %p261
        $region50: #{tpu_custom_call.1} parent=11 // pred_check_branch
          %403 = sbr.rel (%p401) target = $region52
        $region51: #{tpu_custom_call.1} parent=11 // pred_region
          _
        $region52: #{tpu_custom_call.1} parent=11 // pred_fallthru
          _
        // Predicated region
        $region53: #{tpu_custom_call.1} parent=11 // pred_check
          %p404 = pneg %p282
        $region54: #{tpu_custom_call.1} parent=11 // pred_check_branch
          %406 = sbr.rel (%p404) target = $region56
        $region55: #{tpu_custom_call.1} parent=11 // pred_region
          %s408 = ssub.s32 2048, 2048
          %409 = vsyncadd [#allocation9], %s408
          %s410 = sshll.u32 [#allocation8], 4
          %s411 = int_to_ptr.vmem [resolvable:$true] %s410
          %416 = dma.hbm_to_vmem [thread:$0]  %s11, 2048, %s411, [#allocation9], 64, 64, 4
        $region56: #{tpu_custom_call.1} parent=11 // pred_fallthru
          _
        // Predicated region
        $region57: #{tpu_custom_call.1} parent=11 // pred_check
          %p417 = pneg %p303
        $region58: #{tpu_custom_call.1} parent=11 // pred_check_branch
          %419 = sbr.rel (%p417) target = $region60
        $region59: #{tpu_custom_call.1} parent=11 // pred_region
          _
        $region60: #{tpu_custom_call.1} parent=11 // pred_fallthru
          _
      $region12: #{tpu_custom_call.1} parent=5 // pred_fallthru
        _
      %p420 = scmp.lt.s32.totalorder %s25, 2
      // Predicated region
      $region61: #{tpu_custom_call.1} parent=5 // pred_check
        %p421 = pneg %p420
      $region62: #{tpu_custom_call.1} parent=5 // pred_check_branch
        %423 = sbr.rel (%p421) target = $region64
      $region63: #{tpu_custom_call.1} parent=5 // pred_region
        // Predicated region
        $region65: #{tpu_custom_call.1} parent=63 // pred_check
          %p424 = pneg %p45
        $region66: #{tpu_custom_call.1} parent=63 // pred_check_branch
          %426 = sbr.rel (%p424) target = $region68
        $region67: #{tpu_custom_call.1} parent=63 // pred_region
          %s427 = smul.u32 16, %s25
          %p428 = scmp.lt.s32.totalorder %s427, 31
          %s429 = scalar_select %p428, %s427, 31
          %s430 = smul.addr %s429, 8
          %s431 = scalar_lea.vmem %s0, %s430
          %s432 = smul.u32 16, %s25
        $region68: #{tpu_custom_call.1} parent=63 // pred_fallthru
          _
      $region64: #{tpu_custom_call.1} parent=5 // pred_fallthru
        _
      %p433 = scmp.le.s32.totalorder 1, %s25
      %p434 = scmp.lt.s32.totalorder %s25, 3
      %p435 = pnand %p433, %p434
      %p436 = pneg %p435
      // Predicated region
      $region69: #{tpu_custom_call.1} parent=5 // pred_check
        _
      $region70: #{tpu_custom_call.1} parent=5 // pred_check_branch
        %438 = sbr.rel (%p435) target = $region72
      $region71: #{tpu_custom_call.1} parent=5 // pred_region
        %s439 = ssub.s32 %s25, 1
        // Predicated region
        $region73: #{tpu_custom_call.1} parent=71 // pred_check
          %p440 = pneg %p72
        $region74: #{tpu_custom_call.1} parent=71 // pred_check_branch
          %442 = sbr.rel (%p440) target = $region76
        $region75: #{tpu_custom_call.1} parent=71 // pred_region
          %443 = dma.done [#allocation3], 512
        $region76: #{tpu_custom_call.1} parent=71 // pred_fallthru
          _
        // Predicated region
        $region77: #{tpu_custom_call.1} parent=71 // pred_check
          %p444 = pneg %p156
        $region78: #{tpu_custom_call.1} parent=71 // pred_check_branch
          %446 = sbr.rel (%p444) target = $region80
        $region79: #{tpu_custom_call.1} parent=71 // pred_region
          %447 = dma.done [#allocation6], 1024
        $region80: #{tpu_custom_call.1} parent=71 // pred_fallthru
          _
        // Predicated region
        $region81: #{tpu_custom_call.1} parent=71 // pred_check
          %p448 = pneg %p198
        $region82: #{tpu_custom_call.1} parent=71 // pred_check_branch
          %450 = sbr.rel (%p448) target = $region84
        $region83: #{tpu_custom_call.1} parent=71 // pred_region
          %451 = dma.done [#allocation6], 2048
        $region84: #{tpu_custom_call.1} parent=71 // pred_fallthru
          _
        // Predicated region
        $region85: #{tpu_custom_call.1} parent=71 // pred_check
          %p452 = pneg %p282
        $region86: #{tpu_custom_call.1} parent=71 // pred_check_branch
          %454 = sbr.rel (%p452) target = $region88
        $region87: #{tpu_custom_call.1} parent=71 // pred_region
          %455 = dma.done [#allocation9], 2048
        $region88: #{tpu_custom_call.1} parent=71 // pred_fallthru
          _
        %s456 = smul.u32 16, %s30
        %p457 = scmp.lt.s32.totalorder %s456, 31
        %s458 = scalar_select %p457, %s456, 31
        %s459 = smul.addr %s458, 8
        %s460 = scalar_lea.vmem %s0, %s459
        %p461 = pneg %p51
        %p462 = pneg %p48
        %p463 = pneg %p72
        %p464 = pneg %p69
        %p465 = pneg %p93
        %p466 = pneg %p90
        %p467 = pneg %p114
        %p468 = pneg %p111
        %p469 = pneg %p135
        %p470 = pneg %p132
        %p471 = pneg %p156
        %p472 = pneg %p153
        %p473 = pneg %p177
        %p474 = pneg %p174
        %p475 = pneg %p198
        %p476 = pneg %p195
        %p477 = pneg %p219
        %p478 = pneg %p216
        %p479 = pneg %p240
        %p480 = pneg %p237
        %p481 = pneg %p261
        %p482 = pneg %p258
        %p483 = pneg %p282
        %p484 = pneg %p279
        %p485 = pneg %p303
        %p486 = pneg %p300
        %p487 = pneg %p329
        %p488 = pneg %p326
        %s489 = sand.u32 %s316, 1
        %s490 = scalar_lea.sflag [#allocation4], %s489
        %s491 = sand.u32 %s316, 1
        %s492 = scalar_lea.vmem [#allocation10], %s491
        %s493 = smul.u32 16, %s30
        %p494 = scmp.lt.s32.totalorder %s493, 31
        %s495 = scalar_select %p494, %s493, 31
        %s496 = smul.addr %s495, 8
        %s497 = scalar_lea.vmem %s0, %s496
        %s498 = smul.u32 16, %s30
        %v500 = vld [vmem:[%s497] sm:$0xff]
        %v501 = vld [vmem:[%s497 + $0x8] sm:$0xff]
        %v502 = vld [vmem:[%s497 + $0x10] sm:$0xff]
        %v503 = vld [vmem:[%s497 + $0x18] sm:$0xff]
        %v504 = vld [vmem:[%s497 + $0x20] sm:$0xff]
        %v505 = vld [vmem:[%s497 + $0x28] sm:$0xff]
        %v506 = vld [vmem:[%s497 + $0x30] sm:$0xff]
        %v507 = vld [vmem:[%s497 + $0x38] sm:$0xff]
        %v508 = vld [vmem:[%s497 + $0x40] sm:$0xff]
        %v509 = vld [vmem:[%s497 + $0x48] sm:$0xff]
        %v510 = vld [vmem:[%s497 + $0x50] sm:$0xff]
        %v511 = vld [vmem:[%s497 + $0x58] sm:$0xff]
        %v512 = vld [vmem:[%s497 + $0x60] sm:$0xff]
        %v513 = vld [vmem:[%s497 + $0x68] sm:$0xff]
        %v514 = vld [vmem:[%s497 + $0x70] sm:$0xff]
        %v515 = vld [vmem:[%s497 + $0x78] sm:$0xff]
        %v516 = vld [vmem:[#allocation2] sm:$0xff]
        %v517 = vld [vmem:[#allocation2 + $0x8] sm:$0xff]
        %v518 = vld [vmem:[#allocation2 + $0x10] sm:$0xff]
        %v519 = vld [vmem:[#allocation2 + $0x18] sm:$0x3f]
        %v520 = vld [vmem:[%s2] sm:$0x1]
        %v522 = vlaneseq
        %v523 = vshrl.u32 %v522, 7
        %v524 = vsub.s32 0, %v523
        %v525 = vrot.slane %v520, %v524
        %vm527 = vcmask 244736
        %v529 = vsel %vm527, %v500, 0
        %v532 = vsel %vm527, %v501, 0
        %v535 = vsel %vm527, %v502, 0
        %v538 = vsel %vm527, %v503, 0
        %v541 = vsel %vm527, %v504, 0
        %v544 = vsel %vm527, %v505, 0
        %v547 = vsel %vm527, %v506, 0
        %v550 = vsel %vm527, %v507, 0
        %v553 = vsel %vm527, %v508, 0
        %v556 = vsel %vm527, %v509, 0
        %v559 = vsel %vm527, %v510, 0
        %v562 = vsel %vm527, %v511, 0
        %v565 = vsel %vm527, %v512, 0
        %v568 = vsel %vm527, %v513, 0
        %v571 = vsel %vm527, %v514, 0
        %v574 = vsel %vm527, %v515, 0
        %vm576 = vcmask 1045504
        %v578 = vsel %vm576, %v519, 0
        %580 = vmatprep.subr.mxu0 0.0
        %581 = vmatpush1.msra.mxu0 0.0
        %582 = vmatprep.subr.mxu0 0.0
        %583 = vmatpush1.msra.mxu0 0.0
        %584 = vmatprep.subr.mxu0 0.0
        %585 = vmatpush1.msra.mxu0 0.0
        %586 = vmatprep.subr.mxu0 0.0
        %587 = vmatpush1.msra.mxu0 0.0
        %588 = vmatprep.subr.mxu0 0.0
        %589 = vmatpush1.msra.mxu0 0.0
        %590 = vmatprep.subr.mxu0 0.0
        %591 = vmatpush1.msra.mxu0 0.0
        %592 = vmatprep.subr.mxu0 0.0
        %593 = vmatpush1.msra.mxu0 0.0
        %594 = vmatprep.subr.mxu0 0.0
        %595 = vmatpush1.msra.mxu0 0.0
        %596 = vmatprep.subr.mxu0 0.0
        %597 = vmatpush1.msra.mxu0 0.0
        %598 = vmatprep.subr.mxu0 0.0
        %599 = vmatpush1.msra.mxu0 0.0
        %600 = vmatprep.subr.mxu0 0.0
        %601 = vmatpush1.msra.mxu0 0.0
        %602 = vmatprep.subr.mxu0 0.0
        %603 = vmatpush1.msra.mxu0 0.0
        %604 = vmatprep.subr.mxu0 0.0
        %605 = vmatpush1.msra.mxu0 %v578
        %606 = vmatprep.subr.mxu0 0.0
        %607 = vmatpush1.msra.mxu0 %v518
        %608 = vmatprep.subr.mxu0 0.0
        %609 = vmatpush1.msra.mxu0 %v517
        %610 = vmatprep.subr.mxu0 0.0
        %611 = vmatpush1.msra.mxu0 %v516
        %612 = vmatprep.subr.mxu0 0.0
        %613 = vmatpush2.msra.mxu0 0.0
        %614 = vmatprep.subr.mxu0 0.0
        %615 = vmatpush2.msra.mxu0 0.0
        %616 = vmatprep.subr.mxu0 0.0
        %617 = vmatpush2.msra.mxu0 0.0
        %618 = vmatprep.subr.mxu0 0.0
        %619 = vmatpush2.msra.mxu0 0.0
        %620 = vmatprep.subr.mxu0 0.0
        %621 = vmatpush2.msra.mxu0 0.0
        %622 = vmatprep.subr.mxu0 0.0
        %623 = vmatpush2.msra.mxu0 0.0
        %624 = vmatprep.subr.mxu0 0.0
        %625 = vmatpush2.msra.mxu0 0.0
        %626 = vmatprep.subr.mxu0 0.0
        %627 = vmatpush2.msra.mxu0 0.0
        %628 = vmatprep.subr.mxu0 0.0
        %629 = vmatpush2.msra.mxu0 0.0
        %630 = vmatprep.subr.mxu0 0.0
        %631 = vmatpush2.msra.mxu0 0.0
        %632 = vmatprep.subr.mxu0 0.0
        %633 = vmatpush2.msra.mxu0 0.0
        %634 = vmatprep.subr.mxu0 0.0
        %635 = vmatpush2.msra.mxu0 0.0
        %636 = vmatprep.subr.mxu0 0.0
        %637 = vmatpush2.msra.mxu0 0.0
        %638 = vmatprep.subr.mxu0 0.0
        %639 = vmatpush2.msra.mxu0 0.0
        %640 = vmatprep.subr.mxu0 0.0
        %641 = vmatpush2.msra.mxu0 0.0
        %642 = vmatprep.subr.mxu0 0.0
        %643 = vmatpush2.msra.mxu0 0.0
        %644 = vmatprep.mubr.f32.mxu0 0.0
        %645 = vmatmul.mubr.f32.gmra.mxu0 %v529
        %v646 = vpop.f32.mrf.mxu0
        %v647 = vadd.f32 %v525, %v646
        %v648 = vpop.f32.mrf.mxu0
        %649 = vmatprep.mubr.f32.mxu0 0.0
        %650 = vmatmul.mubr.f32.gmra.mxu0 %v532
        %v651 = vpop.f32.mrf.mxu0
        %v652 = vadd.f32 %v525, %v651
        %v653 = vpop.f32.mrf.mxu0
        %654 = vmatprep.mubr.f32.mxu0 0.0
        %655 = vmatmul.mubr.f32.gmra.mxu0 %v535
        %v656 = vpop.f32.mrf.mxu0
        %v657 = vadd.f32 %v525, %v656
        %v658 = vpop.f32.mrf.mxu0
        %659 = vmatprep.mubr.f32.mxu0 0.0
        %660 = vmatmul.mubr.f32.gmra.mxu0 %v538
        %v661 = vpop.f32.mrf.mxu0
        %v662 = vadd.f32 %v525, %v661
        %v663 = vpop.f32.mrf.mxu0
        %664 = vmatprep.mubr.f32.mxu0 0.0
        %665 = vmatmul.mubr.f32.gmra.mxu0 %v541
        %v666 = vpop.f32.mrf.mxu0
        %v667 = vadd.f32 %v525, %v666
        %v668 = vpop.f32.mrf.mxu0
        %669 = vmatprep.mubr.f32.mxu0 0.0
        %670 = vmatmul.mubr.f32.gmra.mxu0 %v544
        %v671 = vpop.f32.mrf.mxu0
        %v672 = vadd.f32 %v525, %v671
        %v673 = vpop.f32.mrf.mxu0
        %674 = vmatprep.mubr.f32.mxu0 0.0
        %675 = vmatmul.mubr.f32.gmra.mxu0 %v547
        %v676 = vpop.f32.mrf.mxu0
        %v677 = vadd.f32 %v525, %v676
        %v678 = vpop.f32.mrf.mxu0
        %679 = vmatprep.mubr.f32.mxu0 0.0
        %680 = vmatmul.mubr.f32.gmra.mxu0 %v550
        %v681 = vpop.f32.mrf.mxu0
        %v682 = vadd.f32 %v525, %v681
        %v683 = vpop.f32.mrf.mxu0
        %684 = vmatprep.mubr.f32.mxu0 0.0
        %685 = vmatmul.mubr.f32.gmra.mxu0 %v553
        %v686 = vpop.f32.mrf.mxu0
        %v687 = vadd.f32 %v525, %v686
        %v688 = vpop.f32.mrf.mxu0
        %689 = vmatprep.mubr.f32.mxu0 0.0
        %690 = vmatmul.mubr.f32.gmra.mxu0 %v556
        %v691 = vpop.f32.mrf.mxu0
        %v692 = vadd.f32 %v525, %v691
        %v693 = vpop.f32.mrf.mxu0
        %694 = vmatprep.mubr.f32.mxu0 0.0
        %695 = vmatmul.mubr.f32.gmra.mxu0 %v559
        %v696 = vpop.f32.mrf.mxu0
        %v697 = vadd.f32 %v525, %v696
        %v698 = vpop.f32.mrf.mxu0
        %699 = vmatprep.mubr.f32.mxu0 0.0
        %700 = vmatmul.mubr.f32.gmra.mxu0 %v562
        %v701 = vpop.f32.mrf.mxu0
        %v702 = vadd.f32 %v525, %v701
        %v703 = vpop.f32.mrf.mxu0
        %704 = vmatprep.mubr.f32.mxu0 0.0
        %705 = vmatmul.mubr.f32.gmra.mxu0 %v565
        %v706 = vpop.f32.mrf.mxu0
        %v707 = vadd.f32 %v525, %v706
        %v708 = vpop.f32.mrf.mxu0
        %709 = vmatprep.mubr.f32.mxu0 0.0
        %710 = vmatmul.mubr.f32.gmra.mxu0 %v568
        %v711 = vpop.f32.mrf.mxu0
        %v712 = vadd.f32 %v525, %v711
        %v713 = vpop.f32.mrf.mxu0
        %714 = vmatprep.mubr.f32.mxu0 0.0
        %715 = vmatmul.mubr.f32.gmra.mxu0 %v571
        %v716 = vpop.f32.mrf.mxu0
        %v717 = vadd.f32 %v525, %v716
        %v718 = vpop.f32.mrf.mxu0
        %719 = vmatprep.mubr.f32.mxu0 0.0
        %720 = vmatmul.mubr.f32.gmra.mxu0 %v574
        %v721 = vpop.f32.mrf.mxu0
        %v722 = vadd.f32 %v525, %v721
        %v723 = vpop.f32.mrf.mxu0
        %724 = vdwg.mxu0
        %v725 = vmax.f32 %v647, 0.0
        %v726 = vmax.f32 %v652, 0.0
        %v727 = vmax.f32 %v657, 0.0
        %v728 = vmax.f32 %v662, 0.0
        %v729 = vmax.f32 %v667, 0.0
        %v730 = vmax.f32 %v672, 0.0
        %v731 = vmax.f32 %v677, 0.0
        %v732 = vmax.f32 %v682, 0.0
        %v733 = vmax.f32 %v687, 0.0
        %v734 = vmax.f32 %v692, 0.0
        %v735 = vmax.f32 %v697, 0.0
        %v736 = vmax.f32 %v702, 0.0
        %v737 = vmax.f32 %v707, 0.0
        %v738 = vmax.f32 %v712, 0.0
        %v739 = vmax.f32 %v717, 0.0
        %v740 = vmax.f32 %v722, 0.0
        %v741 = vpack.c.bf16 %v726, %v725
        %v742 = vpack.c.bf16 %v728, %v727
        %v743 = vpack.c.bf16 %v730, %v729
        %v744 = vpack.c.bf16 %v732, %v731
        %v745 = vpack.c.bf16 %v734, %v733
        %v746 = vpack.c.bf16 %v736, %v735
        %v747 = vpack.c.bf16 %v738, %v737
        %v748 = vpack.c.bf16 %v740, %v739
        %v749 = vld [vmem:[%s3] sm:$0xf]
        %v750 = vld [vmem:[%s3 + $0x4] sm:$0xf]
        %v751 = vld [vmem:[%s3 + $0x8] sm:$0xf]
        %v752 = vld [vmem:[%s3 + $0xc] sm:$0xf]
        %v753 = vld [vmem:[%s3 + $0x10] sm:$0xf]
        %v754 = vld [vmem:[%s3 + $0x14] sm:$0xf]
        %v755 = vld [vmem:[%s3 + $0x18] sm:$0xf]
        %v756 = vld [vmem:[%s3 + $0x1c] sm:$0xf]
        %v757 = vld [vmem:[%s3 + $0x20] sm:$0xf]
        %v758 = vld [vmem:[%s3 + $0x24] sm:$0xf]
        %v759 = vld [vmem:[%s3 + $0x28] sm:$0xf]
        %v760 = vld [vmem:[%s3 + $0x2c] sm:$0xf]
        %v761 = vld [vmem:[%s3 + $0x30] sm:$0xf]
        %v762 = vld [vmem:[%s3 + $0x34] sm:$0xf]
        %v763 = vld [vmem:[%s3 + $0x38] sm:$0xf]
        %v764 = vld [vmem:[%s3 + $0x3c] sm:$0xf]
        %v765 = vld [vmem:[%s4] sm:$0x1]
        %v767 = vlaneseq
        %v768 = vshrl.u32 %v767, 7
        %v769 = vsub.s32 0, %v768
        %v770 = vrot.slane %v765, %v769
        %v788 = vunpack.c.l.b16 %v749
        %v789 = vunpack.c.l.b16 %v750
        %v790 = vunpack.c.l.b16 %v751
        %v791 = vunpack.c.l.b16 %v752
        %v792 = vunpack.c.l.b16 %v753
        %v793 = vunpack.c.l.b16 %v754
        %v794 = vunpack.c.l.b16 %v755
        %v795 = vunpack.c.l.b16 %v756
        %v796 = vunpack.c.l.b16 %v757
        %v797 = vunpack.c.l.b16 %v758
        %v798 = vunpack.c.l.b16 %v759
        %v799 = vunpack.c.l.b16 %v760
        %v800 = vunpack.c.l.b16 %v761
        %v801 = vunpack.c.l.b16 %v762
        %v802 = vunpack.c.l.b16 %v763
        %v803 = vunpack.c.l.b16 %v764
        %v804 = vpack.c.b16 %v789, %v788
        %v805 = vpack.c.b16 %v791, %v790
        %v806 = vpack.c.b16 %v793, %v792
        %v807 = vpack.c.b16 %v795, %v794
        %v808 = vpack.c.b16 %v797, %v796
        %v809 = vpack.c.b16 %v799, %v798
        %v810 = vpack.c.b16 %v801, %v800
        %v811 = vpack.c.b16 %v803, %v802
        %820 = vmatprep.subr.bf16.mxu0 0
        %821 = vmatpush1.bf16.msra.mxu0 %v811
        %822 = vmatprep.subr.bf16.mxu0 0
        %823 = vmatpush1.bf16.msra.mxu0 %v810
        %824 = vmatprep.subr.bf16.mxu0 0
        %825 = vmatpush1.bf16.msra.mxu0 %v809
        %826 = vmatprep.subr.bf16.mxu0 0
        %827 = vmatpush1.bf16.msra.mxu0 %v808
        %828 = vmatprep.subr.bf16.mxu0 0
        %829 = vmatpush1.bf16.msra.mxu0 %v807
        %830 = vmatprep.subr.bf16.mxu0 0
        %831 = vmatpush1.bf16.msra.mxu0 %v806
        %832 = vmatprep.subr.bf16.mxu0 0
        %833 = vmatpush1.bf16.msra.mxu0 %v805
        %834 = vmatprep.subr.bf16.mxu0 0
        %835 = vmatpush1.bf16.msra.mxu0 %v804
        %836 = vmatprep.subr.bf16.mxu0 0
        %837 = vmatpush2.bf16.msra.mxu0 0
        %838 = vmatprep.subr.bf16.mxu0 0
        %839 = vmatpush2.bf16.msra.mxu0 0
        %840 = vmatprep.subr.bf16.mxu0 0
        %841 = vmatpush2.bf16.msra.mxu0 0
        %842 = vmatprep.subr.bf16.mxu0 0
        %843 = vmatpush2.bf16.msra.mxu0 0
        %844 = vmatprep.subr.bf16.mxu0 0
        %845 = vmatpush2.bf16.msra.mxu0 0
        %846 = vmatprep.subr.bf16.mxu0 0
        %847 = vmatpush2.bf16.msra.mxu0 0
        %848 = vmatprep.subr.bf16.mxu0 0
        %849 = vmatpush2.bf16.msra.mxu0 0
        %850 = vmatprep.subr.bf16.mxu0 0
        %851 = vmatpush2.bf16.msra.mxu0 0
        %852 = vmatprep.mubr.bf16.mxu0 0
        %853 = vmatmul.mubr.bf16.gmra.mxu0 %v741
        %v854 = vpop.f32.mrf.mxu0
        %v855 = vadd.f32 %v770, %v854
        %v856 = vpop.f32.mrf.mxu0
        %v857 = vpop.f32.mrf.mxu0
        %v858 = vadd.f32 %v770, %v857
        %v859 = vpop.f32.mrf.mxu0
        %860 = vmatprep.mubr.bf16.mxu0 0
        %861 = vmatmul.mubr.bf16.gmra.mxu0 %v742
        %v862 = vpop.f32.mrf.mxu0
        %v863 = vadd.f32 %v770, %v862
        %v864 = vpop.f32.mrf.mxu0
        %v865 = vpop.f32.mrf.mxu0
        %v866 = vadd.f32 %v770, %v865
        %v867 = vpop.f32.mrf.mxu0
        %868 = vmatprep.mubr.bf16.mxu0 0
        %869 = vmatmul.mubr.bf16.gmra.mxu0 %v743
        %v870 = vpop.f32.mrf.mxu0
        %v871 = vadd.f32 %v770, %v870
        %v872 = vpop.f32.mrf.mxu0
        %v873 = vpop.f32.mrf.mxu0
        %v874 = vadd.f32 %v770, %v873
        %v875 = vpop.f32.mrf.mxu0
        %876 = vmatprep.mubr.bf16.mxu0 0
        %877 = vmatmul.mubr.bf16.gmra.mxu0 %v744
        %v878 = vpop.f32.mrf.mxu0
        %v879 = vadd.f32 %v770, %v878
        %v880 = vpop.f32.mrf.mxu0
        %v881 = vpop.f32.mrf.mxu0
        %v882 = vadd.f32 %v770, %v881
        %v883 = vpop.f32.mrf.mxu0
        %884 = vmatprep.mubr.bf16.mxu0 0
        %885 = vmatmul.mubr.bf16.gmra.mxu0 %v745
        %v886 = vpop.f32.mrf.mxu0
        %v887 = vadd.f32 %v770, %v886
        %v888 = vpop.f32.mrf.mxu0
        %v889 = vpop.f32.mrf.mxu0
        %v890 = vadd.f32 %v770, %v889
        %v891 = vpop.f32.mrf.mxu0
        %892 = vmatprep.mubr.bf16.mxu0 0
        %893 = vmatmul.mubr.bf16.gmra.mxu0 %v746
        %v894 = vpop.f32.mrf.mxu0
        %v895 = vadd.f32 %v770, %v894
        %v896 = vpop.f32.mrf.mxu0
        %v897 = vpop.f32.mrf.mxu0
        %v898 = vadd.f32 %v770, %v897
        %v899 = vpop.f32.mrf.mxu0
        %900 = vmatprep.mubr.bf16.mxu0 0
        %901 = vmatmul.mubr.bf16.gmra.mxu0 %v747
        %v902 = vpop.f32.mrf.mxu0
        %v903 = vadd.f32 %v770, %v902
        %v904 = vpop.f32.mrf.mxu0
        %v905 = vpop.f32.mrf.mxu0
        %v906 = vadd.f32 %v770, %v905
        %v907 = vpop.f32.mrf.mxu0
        %908 = vmatprep.mubr.bf16.mxu0 0
        %909 = vmatmul.mubr.bf16.gmra.mxu0 %v748
        %v910 = vpop.f32.mrf.mxu0
        %v911 = vadd.f32 %v770, %v910
        %v912 = vpop.f32.mrf.mxu0
        %v913 = vpop.f32.mrf.mxu0
        %v914 = vadd.f32 %v770, %v913
        %v915 = vpop.f32.mrf.mxu0
        %916 = vdwg.mxu0
        %v917 = vmax.f32 %v855, 0.0
        %v918 = vmax.f32 %v858, 0.0
        %v919 = vmax.f32 %v863, 0.0
        %v920 = vmax.f32 %v866, 0.0
        %v921 = vmax.f32 %v871, 0.0
        %v922 = vmax.f32 %v874, 0.0
        %v923 = vmax.f32 %v879, 0.0
        %v924 = vmax.f32 %v882, 0.0
        %v925 = vmax.f32 %v887, 0.0
        %v926 = vmax.f32 %v890, 0.0
        %v927 = vmax.f32 %v895, 0.0
        %v928 = vmax.f32 %v898, 0.0
        %v929 = vmax.f32 %v903, 0.0
        %v930 = vmax.f32 %v906, 0.0
        %v931 = vmax.f32 %v911, 0.0
        %v932 = vmax.f32 %v914, 0.0
        %v933 = vpack.c.bf16 %v918, %v917
        %v934 = vpack.c.bf16 %v920, %v919
        %v935 = vpack.c.bf16 %v922, %v921
        %v936 = vpack.c.bf16 %v924, %v923
        %v937 = vpack.c.bf16 %v926, %v925
        %v938 = vpack.c.bf16 %v928, %v927
        %v939 = vpack.c.bf16 %v930, %v929
        %v940 = vpack.c.bf16 %v932, %v931
        %v941 = vld [vmem:[#allocation5] sm:$0xf]
        %v942 = vld [vmem:[#allocation5 + $0x4] sm:$0xf]
        %v943 = vld [vmem:[#allocation5 + $0x8] sm:$0xf]
        %v944 = vld [vmem:[#allocation5 + $0xc] sm:$0xf]
        %v945 = vld [vmem:[#allocation5 + $0x10] sm:$0xf]
        %v946 = vld [vmem:[#allocation5 + $0x14] sm:$0xf]
        %v947 = vld [vmem:[#allocation5 + $0x18] sm:$0xf]
        %v948 = vld [vmem:[#allocation5 + $0x1c] sm:$0xf]
        %v949 = vld [vmem:[#allocation5 + $0x20] sm:$0xf]
        %v950 = vld [vmem:[#allocation5 + $0x24] sm:$0xf]
        %v951 = vld [vmem:[#allocation5 + $0x28] sm:$0xf]
        %v952 = vld [vmem:[#allocation5 + $0x2c] sm:$0xf]
        %v953 = vld [vmem:[#allocation5 + $0x30] sm:$0xf]
        %v954 = vld [vmem:[#allocation5 + $0x34] sm:$0xf]
        %v955 = vld [vmem:[#allocation5 + $0x38] sm:$0xf]
        %v956 = vld [vmem:[#allocation5 + $0x3c] sm:$0xf]
        %v957 = vld [vmem:[%s6] sm:$0x1]
        %v959 = vlaneseq
        %v960 = vshrl.u32 %v959, 7
        %v961 = vsub.s32 0, %v960
        %v962 = vrot.slane %v957, %v961
        %v980 = vunpack.c.l.b16 %v941
        %v981 = vunpack.c.l.b16 %v942
        %v982 = vunpack.c.l.b16 %v943
        %v983 = vunpack.c.l.b16 %v944
        %v984 = vunpack.c.l.b16 %v945
        %v985 = vunpack.c.l.b16 %v946
        %v986 = vunpack.c.l.b16 %v947
        %v987 = vunpack.c.l.b16 %v948
        %v988 = vunpack.c.l.b16 %v949
        %v989 = vunpack.c.l.b16 %v950
        %v990 = vunpack.c.l.b16 %v951
        %v991 = vunpack.c.l.b16 %v952
        %v992 = vunpack.c.l.b16 %v953
        %v993 = vunpack.c.l.b16 %v954
        %v994 = vunpack.c.l.b16 %v955
        %v995 = vunpack.c.l.b16 %v956
        %v996 = vpack.c.b16 %v981, %v980
        %v997 = vpack.c.b16 %v983, %v982
        %v998 = vpack.c.b16 %v985, %v984
        %v999 = vpack.c.b16 %v987, %v986
        %v1000 = vpack.c.b16 %v989, %v988
        %v1001 = vpack.c.b16 %v991, %v990
        %v1002 = vpack.c.b16 %v993, %v992
        %v1003 = vpack.c.b16 %v995, %v994
        %1012 = vmatprep.subr.bf16.mxu0 0
        %1013 = vmatpush1.bf16.msra.mxu0 %v1003
        %1014 = vmatprep.subr.bf16.mxu0 0
        %1015 = vmatpush1.bf16.msra.mxu0 %v1002
        %1016 = vmatprep.subr.bf16.mxu0 0
        %1017 = vmatpush1.bf16.msra.mxu0 %v1001
        %1018 = vmatprep.subr.bf16.mxu0 0
        %1019 = vmatpush1.bf16.msra.mxu0 %v1000
        %1020 = vmatprep.subr.bf16.mxu0 0
        %1021 = vmatpush1.bf16.msra.mxu0 %v999
        %1022 = vmatprep.subr.bf16.mxu0 0
        %1023 = vmatpush1.bf16.msra.mxu0 %v998
        %1024 = vmatprep.subr.bf16.mxu0 0
        %1025 = vmatpush1.bf16.msra.mxu0 %v997
        %1026 = vmatprep.subr.bf16.mxu0 0
        %1027 = vmatpush1.bf16.msra.mxu0 %v996
        %1028 = vmatprep.subr.bf16.mxu0 0
        %1029 = vmatpush2.bf16.msra.mxu0 0
        %1030 = vmatprep.subr.bf16.mxu0 0
        %1031 = vmatpush2.bf16.msra.mxu0 0
        %1032 = vmatprep.subr.bf16.mxu0 0
        %1033 = vmatpush2.bf16.msra.mxu0 0
        %1034 = vmatprep.subr.bf16.mxu0 0
        %1035 = vmatpush2.bf16.msra.mxu0 0
        %1036 = vmatprep.subr.bf16.mxu0 0
        %1037 = vmatpush2.bf16.msra.mxu0 0
        %1038 = vmatprep.subr.bf16.mxu0 0
        %1039 = vmatpush2.bf16.msra.mxu0 0
        %1040 = vmatprep.subr.bf16.mxu0 0
        %1041 = vmatpush2.bf16.msra.mxu0 0
        %1042 = vmatprep.subr.bf16.mxu0 0
        %1043 = vmatpush2.bf16.msra.mxu0 0
        %1044 = vmatprep.mubr.bf16.mxu0 0
        %1045 = vmatmul.mubr.bf16.gmra.mxu0 %v933
        %v1046 = vpop.f32.mrf.mxu0
        %v1047 = vadd.f32 %v962, %v1046
        %v1048 = vpop.f32.mrf.mxu0
        %v1049 = vpop.f32.mrf.mxu0
        %v1050 = vadd.f32 %v962, %v1049
        %v1051 = vpop.f32.mrf.mxu0
        %1052 = vmatprep.mubr.bf16.mxu0 0
        %1053 = vmatmul.mubr.bf16.gmra.mxu0 %v934
        %v1054 = vpop.f32.mrf.mxu0
        %v1055 = vadd.f32 %v962, %v1054
        %v1056 = vpop.f32.mrf.mxu0
        %v1057 = vpop.f32.mrf.mxu0
        %v1058 = vadd.f32 %v962, %v1057
        %v1059 = vpop.f32.mrf.mxu0
        %1060 = vmatprep.mubr.bf16.mxu0 0
        %1061 = vmatmul.mubr.bf16.gmra.mxu0 %v935
        %v1062 = vpop.f32.mrf.mxu0
        %v1063 = vadd.f32 %v962, %v1062
        %v1064 = vpop.f32.mrf.mxu0
        %v1065 = vpop.f32.mrf.mxu0
        %v1066 = vadd.f32 %v962, %v1065
        %v1067 = vpop.f32.mrf.mxu0
        %1068 = vmatprep.mubr.bf16.mxu0 0
        %1069 = vmatmul.mubr.bf16.gmra.mxu0 %v936
        %v1070 = vpop.f32.mrf.mxu0
        %v1071 = vadd.f32 %v962, %v1070
        %v1072 = vpop.f32.mrf.mxu0
        %v1073 = vpop.f32.mrf.mxu0
        %v1074 = vadd.f32 %v962, %v1073
        %v1075 = vpop.f32.mrf.mxu0
        %1076 = vmatprep.mubr.bf16.mxu0 0
        %1077 = vmatmul.mubr.bf16.gmra.mxu0 %v937
        %v1078 = vpop.f32.mrf.mxu0
        %v1079 = vadd.f32 %v962, %v1078
        %v1080 = vpop.f32.mrf.mxu0
        %v1081 = vpop.f32.mrf.mxu0
        %v1082 = vadd.f32 %v962, %v1081
        %v1083 = vpop.f32.mrf.mxu0
        %1084 = vmatprep.mubr.bf16.mxu0 0
        %1085 = vmatmul.mubr.bf16.gmra.mxu0 %v938
        %v1086 = vpop.f32.mrf.mxu0
        %v1087 = vadd.f32 %v962, %v1086
        %v1088 = vpop.f32.mrf.mxu0
        %v1089 = vpop.f32.mrf.mxu0
        %v1090 = vadd.f32 %v962, %v1089
        %v1091 = vpop.f32.mrf.mxu0
        %1092 = vmatprep.mubr.bf16.mxu0 0
        %1093 = vmatmul.mubr.bf16.gmra.mxu0 %v939
        %v1094 = vpop.f32.mrf.mxu0
        %v1095 = vadd.f32 %v962, %v1094
        %v1096 = vpop.f32.mrf.mxu0
        %v1097 = vpop.f32.mrf.mxu0
        %v1098 = vadd.f32 %v962, %v1097
        %v1099 = vpop.f32.mrf.mxu0
        %1100 = vmatprep.mubr.bf16.mxu0 0
        %1101 = vmatmul.mubr.bf16.gmra.mxu0 %v940
        %v1102 = vpop.f32.mrf.mxu0
        %v1103 = vadd.f32 %v962, %v1102
        %v1104 = vpop.f32.mrf.mxu0
        %v1105 = vpop.f32.mrf.mxu0
        %v1106 = vadd.f32 %v962, %v1105
        %v1107 = vpop.f32.mrf.mxu0
        %1108 = vdwg.mxu0
        %v1109 = vmax.f32 %v1047, 0.0
        %v1110 = vmax.f32 %v1050, 0.0
        %v1111 = vmax.f32 %v1055, 0.0
        %v1112 = vmax.f32 %v1058, 0.0
        %v1113 = vmax.f32 %v1063, 0.0
        %v1114 = vmax.f32 %v1066, 0.0
        %v1115 = vmax.f32 %v1071, 0.0
        %v1116 = vmax.f32 %v1074, 0.0
        %v1117 = vmax.f32 %v1079, 0.0
        %v1118 = vmax.f32 %v1082, 0.0
        %v1119 = vmax.f32 %v1087, 0.0
        %v1120 = vmax.f32 %v1090, 0.0
        %v1121 = vmax.f32 %v1095, 0.0
        %v1122 = vmax.f32 %v1098, 0.0
        %v1123 = vmax.f32 %v1103, 0.0
        %v1124 = vmax.f32 %v1106, 0.0
        %v1125 = vpack.c.bf16 %v1110, %v1109
        %v1126 = vpack.c.bf16 %v1112, %v1111
        %v1127 = vpack.c.bf16 %v1114, %v1113
        %v1128 = vpack.c.bf16 %v1116, %v1115
        %v1129 = vpack.c.bf16 %v1118, %v1117
        %v1130 = vpack.c.bf16 %v1120, %v1119
        %v1131 = vpack.c.bf16 %v1122, %v1121
        %v1132 = vpack.c.bf16 %v1124, %v1123
        %v1133 = vld [vmem:[#allocation7] sm:$0xff]
        %v1134 = vld [vmem:[#allocation7 + $0x8] sm:$0xff]
        %v1135 = vld [vmem:[#allocation7 + $0x10] sm:$0xff]
        %v1136 = vld [vmem:[#allocation7 + $0x18] sm:$0xff]
        %v1137 = vld [vmem:[#allocation7 + $0x20] sm:$0xff]
        %v1138 = vld [vmem:[#allocation7 + $0x28] sm:$0xff]
        %v1139 = vld [vmem:[#allocation7 + $0x30] sm:$0xff]
        %v1140 = vld [vmem:[#allocation7 + $0x38] sm:$0xff]
        %v1141 = vld [vmem:[#allocation7 + $0x40] sm:$0xff]
        %v1142 = vld [vmem:[#allocation7 + $0x48] sm:$0xff]
        %v1143 = vld [vmem:[#allocation7 + $0x50] sm:$0xff]
        %v1144 = vld [vmem:[#allocation7 + $0x58] sm:$0xff]
        %v1145 = vld [vmem:[#allocation7 + $0x60] sm:$0xff]
        %v1146 = vld [vmem:[#allocation7 + $0x68] sm:$0xff]
        %v1147 = vld [vmem:[#allocation7 + $0x70] sm:$0xff]
        %v1148 = vld [vmem:[#allocation7 + $0x78] sm:$0xff]
        %v1149 = vld [vmem:[%s8] sm:$0x3]
        %v1151 = vlaneseq
        %v1152 = vshrl.u32 %v1151, 7
        %v1153 = vsub.s32 0, %v1152
        %v1154 = vrot.slane %v1149, %v1153
        %v1155 = vlaneseq
        %v1156 = vshrl.u32 %v1155, 7
        %v1157 = vsub.s32 1, %v1156
        %v1158 = vrot.slane %v1149, %v1157
        %v1177 = vunpack.c.l.b16 %v1133
        %v1178 = vunpack.c.h.b16 %v1133
        %v1179 = vunpack.c.l.b16 %v1134
        %v1180 = vunpack.c.h.b16 %v1134
        %v1181 = vunpack.c.l.b16 %v1135
        %v1182 = vunpack.c.h.b16 %v1135
        %v1183 = vunpack.c.l.b16 %v1136
        %v1184 = vunpack.c.h.b16 %v1136
        %v1185 = vunpack.c.l.b16 %v1137
        %v1186 = vunpack.c.h.b16 %v1137
        %v1187 = vunpack.c.l.b16 %v1138
        %v1188 = vunpack.c.h.b16 %v1138
        %v1189 = vunpack.c.l.b16 %v1139
        %v1190 = vunpack.c.h.b16 %v1139
        %v1191 = vunpack.c.l.b16 %v1140
        %v1192 = vunpack.c.h.b16 %v1140
        %v1193 = vunpack.c.l.b16 %v1141
        %v1194 = vunpack.c.h.b16 %v1141
        %v1195 = vunpack.c.l.b16 %v1142
        %v1196 = vunpack.c.h.b16 %v1142
        %v1197 = vunpack.c.l.b16 %v1143
        %v1198 = vunpack.c.h.b16 %v1143
        %v1199 = vunpack.c.l.b16 %v1144
        %v1200 = vunpack.c.h.b16 %v1144
        %v1201 = vunpack.c.l.b16 %v1145
        %v1202 = vunpack.c.h.b16 %v1145
        %v1203 = vunpack.c.l.b16 %v1146
        %v1204 = vunpack.c.h.b16 %v1146
        %v1205 = vunpack.c.l.b16 %v1147
        %v1206 = vunpack.c.h.b16 %v1147
        %v1207 = vunpack.c.l.b16 %v1148
        %v1208 = vunpack.c.h.b16 %v1148
        %v1209 = vpack.c.b16 %v1179, %v1177
        %v1210 = vpack.c.b16 %v1180, %v1178
        %v1211 = vpack.c.b16 %v1183, %v1181
        %v1212 = vpack.c.b16 %v1184, %v1182
        %v1213 = vpack.c.b16 %v1187, %v1185
        %v1214 = vpack.c.b16 %v1188, %v1186
        %v1215 = vpack.c.b16 %v1191, %v1189
        %v1216 = vpack.c.b16 %v1192, %v1190
        %v1217 = vpack.c.b16 %v1195, %v1193
        %v1218 = vpack.c.b16 %v1196, %v1194
        %v1219 = vpack.c.b16 %v1199, %v1197
        %v1220 = vpack.c.b16 %v1200, %v1198
        %v1221 = vpack.c.b16 %v1203, %v1201
        %v1222 = vpack.c.b16 %v1204, %v1202
        %v1223 = vpack.c.b16 %v1207, %v1205
        %v1224 = vpack.c.b16 %v1208, %v1206
        %1241 = vmatprep.subr.bf16.mxu0 %v1224
        %1242 = vmatpush1.bf16.msra.mxu0 %v1223
        %1243 = vmatprep.subr.bf16.mxu0 %v1222
        %1244 = vmatpush1.bf16.msra.mxu0 %v1221
        %1245 = vmatprep.subr.bf16.mxu0 %v1220
        %1246 = vmatpush1.bf16.msra.mxu0 %v1219
        %1247 = vmatprep.subr.bf16.mxu0 %v1218
        %1248 = vmatpush1.bf16.msra.mxu0 %v1217
        %1249 = vmatprep.subr.bf16.mxu0 %v1216
        %1250 = vmatpush1.bf16.msra.mxu0 %v1215
        %1251 = vmatprep.subr.bf16.mxu0 %v1214
        %1252 = vmatpush1.bf16.msra.mxu0 %v1213
        %1253 = vmatprep.subr.bf16.mxu0 %v1212
        %1254 = vmatpush1.bf16.msra.mxu0 %v1211
        %1255 = vmatprep.subr.bf16.mxu0 %v1210
        %1256 = vmatpush1.bf16.msra.mxu0 %v1209
        %1257 = vmatprep.subr.bf16.mxu0 0
        %1258 = vmatpush2.bf16.msra.mxu0 0
        %1259 = vmatprep.subr.bf16.mxu0 0
        %1260 = vmatpush2.bf16.msra.mxu0 0
        %1261 = vmatprep.subr.bf16.mxu0 0
        %1262 = vmatpush2.bf16.msra.mxu0 0
        %1263 = vmatprep.subr.bf16.mxu0 0
        %1264 = vmatpush2.bf16.msra.mxu0 0
        %1265 = vmatprep.subr.bf16.mxu0 0
        %1266 = vmatpush2.bf16.msra.mxu0 0
        %1267 = vmatprep.subr.bf16.mxu0 0
        %1268 = vmatpush2.bf16.msra.mxu0 0
        %1269 = vmatprep.subr.bf16.mxu0 0
        %1270 = vmatpush2.bf16.msra.mxu0 0
        %1271 = vmatprep.subr.bf16.mxu0 0
        %1272 = vmatpush2.bf16.msra.mxu0 0
        %1273 = vmatprep.mubr.bf16.mxu0 0
        %1274 = vmatmul.mubr.bf16.gmra.mxu0 %v1125
        %v1275 = vpop.f32.mrf.mxu0
        %v1276 = vadd.f32 %v1154, %v1275
        %v1277 = vpop.f32.mrf.mxu0
        %v1278 = vadd.f32 %v1158, %v1277
        %v1279 = vpop.f32.mrf.mxu0
        %v1280 = vadd.f32 %v1154, %v1279
        %v1281 = vpop.f32.mrf.mxu0
        %v1282 = vadd.f32 %v1158, %v1281
        %1283 = vmatprep.mubr.bf16.mxu0 0
        %1284 = vmatmul.mubr.bf16.gmra.mxu0 %v1126
        %v1285 = vpop.f32.mrf.mxu0
        %v1286 = vadd.f32 %v1154, %v1285
        %v1287 = vpop.f32.mrf.mxu0
        %v1288 = vadd.f32 %v1158, %v1287
        %v1289 = vpop.f32.mrf.mxu0
        %v1290 = vadd.f32 %v1154, %v1289
        %v1291 = vpop.f32.mrf.mxu0
        %v1292 = vadd.f32 %v1158, %v1291
        %1293 = vmatprep.mubr.bf16.mxu0 0
        %1294 = vmatmul.mubr.bf16.gmra.mxu0 %v1127
        %v1295 = vpop.f32.mrf.mxu0
        %v1296 = vadd.f32 %v1154, %v1295
        %v1297 = vpop.f32.mrf.mxu0
        %v1298 = vadd.f32 %v1158, %v1297
        %v1299 = vpop.f32.mrf.mxu0
        %v1300 = vadd.f32 %v1154, %v1299
        %v1301 = vpop.f32.mrf.mxu0
        %v1302 = vadd.f32 %v1158, %v1301
        %1303 = vmatprep.mubr.bf16.mxu0 0
        %1304 = vmatmul.mubr.bf16.gmra.mxu0 %v1128
        %v1305 = vpop.f32.mrf.mxu0
        %v1306 = vadd.f32 %v1154, %v1305
        %v1307 = vpop.f32.mrf.mxu0
        %v1308 = vadd.f32 %v1158, %v1307
        %v1309 = vpop.f32.mrf.mxu0
        %v1310 = vadd.f32 %v1154, %v1309
        %v1311 = vpop.f32.mrf.mxu0
        %v1312 = vadd.f32 %v1158, %v1311
        %1313 = vmatprep.mubr.bf16.mxu0 0
        %1314 = vmatmul.mubr.bf16.gmra.mxu0 %v1129
        %v1315 = vpop.f32.mrf.mxu0
        %v1316 = vadd.f32 %v1154, %v1315
        %v1317 = vpop.f32.mrf.mxu0
        %v1318 = vadd.f32 %v1158, %v1317
        %v1319 = vpop.f32.mrf.mxu0
        %v1320 = vadd.f32 %v1154, %v1319
        %v1321 = vpop.f32.mrf.mxu0
        %v1322 = vadd.f32 %v1158, %v1321
        %1323 = vmatprep.mubr.bf16.mxu0 0
        %1324 = vmatmul.mubr.bf16.gmra.mxu0 %v1130
        %v1325 = vpop.f32.mrf.mxu0
        %v1326 = vadd.f32 %v1154, %v1325
        %v1327 = vpop.f32.mrf.mxu0
        %v1328 = vadd.f32 %v1158, %v1327
        %v1329 = vpop.f32.mrf.mxu0
        %v1330 = vadd.f32 %v1154, %v1329
        %v1331 = vpop.f32.mrf.mxu0
        %v1332 = vadd.f32 %v1158, %v1331
        %1333 = vmatprep.mubr.bf16.mxu0 0
        %1334 = vmatmul.mubr.bf16.gmra.mxu0 %v1131
        %v1335 = vpop.f32.mrf.mxu0
        %v1336 = vadd.f32 %v1154, %v1335
        %v1337 = vpop.f32.mrf.mxu0
        %v1338 = vadd.f32 %v1158, %v1337
        %v1339 = vpop.f32.mrf.mxu0
        %v1340 = vadd.f32 %v1154, %v1339
        %v1341 = vpop.f32.mrf.mxu0
        %v1342 = vadd.f32 %v1158, %v1341
        %1343 = vmatprep.mubr.bf16.mxu0 0
        %1344 = vmatmul.mubr.bf16.gmra.mxu0 %v1132
        %v1345 = vpop.f32.mrf.mxu0
        %v1346 = vadd.f32 %v1154, %v1345
        %v1347 = vpop.f32.mrf.mxu0
        %v1348 = vadd.f32 %v1158, %v1347
        %v1349 = vpop.f32.mrf.mxu0
        %v1350 = vadd.f32 %v1154, %v1349
        %v1351 = vpop.f32.mrf.mxu0
        %v1352 = vadd.f32 %v1158, %v1351
        %1353 = vdwg.mxu0
        %v1354 = vmul.f32 %v1276, 0.5
        %v1355 = vmul.f32 %v1278, 0.5
        %v1356 = vmul.f32 %v1280, 0.5
        %v1357 = vmul.f32 %v1282, 0.5
        %v1358 = vmul.f32 %v1286, 0.5
        %v1359 = vmul.f32 %v1288, 0.5
        %v1360 = vmul.f32 %v1290, 0.5
        %v1361 = vmul.f32 %v1292, 0.5
        %v1362 = vmul.f32 %v1296, 0.5
        %v1363 = vmul.f32 %v1298, 0.5
        %v1364 = vmul.f32 %v1300, 0.5
        %v1365 = vmul.f32 %v1302, 0.5
        %v1366 = vmul.f32 %v1306, 0.5
        %v1367 = vmul.f32 %v1308, 0.5
        %v1368 = vmul.f32 %v1310, 0.5
        %v1369 = vmul.f32 %v1312, 0.5
        %v1370 = vmul.f32 %v1316, 0.5
        %v1371 = vmul.f32 %v1318, 0.5
        %v1372 = vmul.f32 %v1320, 0.5
        %v1373 = vmul.f32 %v1322, 0.5
        %v1374 = vmul.f32 %v1326, 0.5
        %v1375 = vmul.f32 %v1328, 0.5
        %v1376 = vmul.f32 %v1330, 0.5
        %v1377 = vmul.f32 %v1332, 0.5
        %v1378 = vmul.f32 %v1336, 0.5
        %v1379 = vmul.f32 %v1338, 0.5
        %v1380 = vmul.f32 %v1340, 0.5
        %v1381 = vmul.f32 %v1342, 0.5
        %v1382 = vmul.f32 %v1346, 0.5
        %v1383 = vmul.f32 %v1348, 0.5
        %v1384 = vmul.f32 %v1350, 0.5
        %v1385 = vmul.f32 %v1352, 0.5
        %v1386 = vtanh.pop %v1354
        %v1387 = vtanh.pop %v1355
        %v1388 = vtanh.pop %v1356
        %v1389 = vtanh.pop %v1357
        %v1390 = vtanh.pop %v1358
        %v1391 = vtanh.pop %v1359
        %v1392 = vtanh.pop %v1360
        %v1393 = vtanh.pop %v1361
        %v1394 = vtanh.pop %v1362
        %v1395 = vtanh.pop %v1363
        %v1396 = vtanh.pop %v1364
        %v1397 = vtanh.pop %v1365
        %v1398 = vtanh.pop %v1366
        %v1399 = vtanh.pop %v1367
        %v1400 = vtanh.pop %v1368
        %v1401 = vtanh.pop %v1369
        %v1402 = vtanh.pop %v1370
        %v1403 = vtanh.pop %v1371
        %v1404 = vtanh.pop %v1372
        %v1405 = vtanh.pop %v1373
        %v1406 = vtanh.pop %v1374
        %v1407 = vtanh.pop %v1375
        %v1408 = vtanh.pop %v1376
        %v1409 = vtanh.pop %v1377
        %v1410 = vtanh.pop %v1378
        %v1411 = vtanh.pop %v1379
        %v1412 = vtanh.pop %v1380
        %v1413 = vtanh.pop %v1381
        %v1414 = vtanh.pop %v1382
        %v1415 = vtanh.pop %v1383
        %v1416 = vtanh.pop %v1384
        %v1417 = vtanh.pop %v1385
        %v1418 = vmul.f32 %v1386, 0.5
        %v1419 = vmul.f32 %v1387, 0.5
        %v1420 = vmul.f32 %v1388, 0.5
        %v1421 = vmul.f32 %v1389, 0.5
        %v1422 = vmul.f32 %v1390, 0.5
        %v1423 = vmul.f32 %v1391, 0.5
        %v1424 = vmul.f32 %v1392, 0.5
        %v1425 = vmul.f32 %v1393, 0.5
        %v1426 = vmul.f32 %v1394, 0.5
        %v1427 = vmul.f32 %v1395, 0.5
        %v1428 = vmul.f32 %v1396, 0.5
        %v1429 = vmul.f32 %v1397, 0.5
        %v1430 = vmul.f32 %v1398, 0.5
        %v1431 = vmul.f32 %v1399, 0.5
        %v1432 = vmul.f32 %v1400, 0.5
        %v1433 = vmul.f32 %v1401, 0.5
        %v1434 = vmul.f32 %v1402, 0.5
        %v1435 = vmul.f32 %v1403, 0.5
        %v1436 = vmul.f32 %v1404, 0.5
        %v1437 = vmul.f32 %v1405, 0.5
        %v1438 = vmul.f32 %v1406, 0.5
        %v1439 = vmul.f32 %v1407, 0.5
        %v1440 = vmul.f32 %v1408, 0.5
        %v1441 = vmul.f32 %v1409, 0.5
        %v1442 = vmul.f32 %v1410, 0.5
        %v1443 = vmul.f32 %v1411, 0.5
        %v1444 = vmul.f32 %v1412, 0.5
        %v1445 = vmul.f32 %v1413, 0.5
        %v1446 = vmul.f32 %v1414, 0.5
        %v1447 = vmul.f32 %v1415, 0.5
        %v1448 = vmul.f32 %v1416, 0.5
        %v1449 = vmul.f32 %v1417, 0.5
        %v1450 = vadd.f32 %v1418, 0.5
        %v1451 = vadd.f32 %v1419, 0.5
        %v1452 = vadd.f32 %v1420, 0.5
        %v1453 = vadd.f32 %v1421, 0.5
        %v1454 = vadd.f32 %v1422, 0.5
        %v1455 = vadd.f32 %v1423, 0.5
        %v1456 = vadd.f32 %v1424, 0.5
        %v1457 = vadd.f32 %v1425, 0.5
        %v1458 = vadd.f32 %v1426, 0.5
        %v1459 = vadd.f32 %v1427, 0.5
        %v1460 = vadd.f32 %v1428, 0.5
        %v1461 = vadd.f32 %v1429, 0.5
        %v1462 = vadd.f32 %v1430, 0.5
        %v1463 = vadd.f32 %v1431, 0.5
        %v1464 = vadd.f32 %v1432, 0.5
        %v1465 = vadd.f32 %v1433, 0.5
        %v1466 = vadd.f32 %v1434, 0.5
        %v1467 = vadd.f32 %v1435, 0.5
        %v1468 = vadd.f32 %v1436, 0.5
        %v1469 = vadd.f32 %v1437, 0.5
        %v1470 = vadd.f32 %v1438, 0.5
        %v1471 = vadd.f32 %v1439, 0.5
        %v1472 = vadd.f32 %v1440, 0.5
        %v1473 = vadd.f32 %v1441, 0.5
        %v1474 = vadd.f32 %v1442, 0.5
        %v1475 = vadd.f32 %v1443, 0.5
        %v1476 = vadd.f32 %v1444, 0.5
        %v1477 = vadd.f32 %v1445, 0.5
        %v1478 = vadd.f32 %v1446, 0.5
        %v1479 = vadd.f32 %v1447, 0.5
        %v1480 = vadd.f32 %v1448, 0.5
        %v1481 = vadd.f32 %v1449, 0.5
        %v1482 = vpack.c.bf16 %v1452, %v1450
        %v1483 = vpack.c.bf16 %v1453, %v1451
        %v1484 = vpack.c.bf16 %v1456, %v1454
        %v1485 = vpack.c.bf16 %v1457, %v1455
        %v1486 = vpack.c.bf16 %v1460, %v1458
        %v1487 = vpack.c.bf16 %v1461, %v1459
        %v1488 = vpack.c.bf16 %v1464, %v1462
        %v1489 = vpack.c.bf16 %v1465, %v1463
        %v1490 = vpack.c.bf16 %v1468, %v1466
        %v1491 = vpack.c.bf16 %v1469, %v1467
        %v1492 = vpack.c.bf16 %v1472, %v1470
        %v1493 = vpack.c.bf16 %v1473, %v1471
        %v1494 = vpack.c.bf16 %v1476, %v1474
        %v1495 = vpack.c.bf16 %v1477, %v1475
        %v1496 = vpack.c.bf16 %v1480, %v1478
        %v1497 = vpack.c.bf16 %v1481, %v1479
        %v1498 = vld [vmem:[%s9] sm:$0xff]
        %v1499 = vld [vmem:[%s9 + $0x8] sm:$0xff]
        %v1500 = vld [vmem:[%s9 + $0x10] sm:$0xff]
        %v1501 = vld [vmem:[%s9 + $0x18] sm:$0xff]
        %v1502 = vld [vmem:[%s9 + $0x20] sm:$0xff]
        %v1503 = vld [vmem:[%s9 + $0x28] sm:$0xff]
        %v1504 = vld [vmem:[%s9 + $0x30] sm:$0xff]
        %v1505 = vld [vmem:[%s9 + $0x38] sm:$0xff]
        %v1506 = vld [vmem:[%s9 + $0x40] sm:$0xff]
        %v1507 = vld [vmem:[%s9 + $0x48] sm:$0xff]
        %v1508 = vld [vmem:[%s9 + $0x50] sm:$0xff]
        %v1509 = vld [vmem:[%s9 + $0x58] sm:$0xff]
        %v1510 = vld [vmem:[%s9 + $0x60] sm:$0xff]
        %v1511 = vld [vmem:[%s9 + $0x68] sm:$0xff]
        %v1512 = vld [vmem:[%s9 + $0x70] sm:$0xff]
        %v1513 = vld [vmem:[%s9 + $0x78] sm:$0xff]
        %v1514 = vld [vmem:[%s9 + $0x80] sm:$0xff]
        %v1515 = vld [vmem:[%s9 + $0x88] sm:$0xff]
        %v1516 = vld [vmem:[%s9 + $0x90] sm:$0xff]
        %v1517 = vld [vmem:[%s9 + $0x98] sm:$0xff]
        %v1518 = vld [vmem:[%s9 + $0xa0] sm:$0xff]
        %v1519 = vld [vmem:[%s9 + $0xa8] sm:$0xff]
        %v1520 = vld [vmem:[%s9 + $0xb0] sm:$0xff]
        %v1521 = vld [vmem:[%s9 + $0xb8] sm:$0xff]
        %v1522 = vld [vmem:[%s9 + $0xc0] sm:$0xff]
        %v1523 = vld [vmem:[%s9 + $0xc8] sm:$0xff]
        %v1524 = vld [vmem:[%s9 + $0xd0] sm:$0xff]
        %v1525 = vld [vmem:[%s9 + $0xd8] sm:$0xff]
        %v1526 = vld [vmem:[%s9 + $0xe0] sm:$0xff]
        %v1527 = vld [vmem:[%s9 + $0xe8] sm:$0xff]
        %v1528 = vld [vmem:[%s9 + $0xf0] sm:$0xff]
        %v1529 = vld [vmem:[%s9 + $0xf8] sm:$0xff]
        %v1530 = vld [vmem:[%s10] sm:$0x3]
        %v1532 = vlaneseq
        %v1533 = vshrl.u32 %v1532, 7
        %v1534 = vsub.s32 0, %v1533
        %v1535 = vrot.slane %v1530, %v1534
        %v1536 = vlaneseq
        %v1537 = vshrl.u32 %v1536, 7
        %v1538 = vsub.s32 1, %v1537
        %v1539 = vrot.slane %v1530, %v1538
        %v1574 = vunpack.c.l.b16 %v1498
        %v1575 = vunpack.c.h.b16 %v1498
        %v1576 = vunpack.c.l.b16 %v1499
        %v1577 = vunpack.c.h.b16 %v1499
        %v1578 = vunpack.c.l.b16 %v1500
        %v1579 = vunpack.c.h.b16 %v1500
        %v1580 = vunpack.c.l.b16 %v1501
        %v1581 = vunpack.c.h.b16 %v1501
        %v1582 = vunpack.c.l.b16 %v1502
        %v1583 = vunpack.c.h.b16 %v1502
        %v1584 = vunpack.c.l.b16 %v1503
        %v1585 = vunpack.c.h.b16 %v1503
        %v1586 = vunpack.c.l.b16 %v1504
        %v1587 = vunpack.c.h.b16 %v1504
        %v1588 = vunpack.c.l.b16 %v1505
        %v1589 = vunpack.c.h.b16 %v1505
        %v1590 = vunpack.c.l.b16 %v1506
        %v1591 = vunpack.c.h.b16 %v1506
        %v1592 = vunpack.c.l.b16 %v1507
        %v1593 = vunpack.c.h.b16 %v1507
        %v1594 = vunpack.c.l.b16 %v1508
        %v1595 = vunpack.c.h.b16 %v1508
        %v1596 = vunpack.c.l.b16 %v1509
        %v1597 = vunpack.c.h.b16 %v1509
        %v1598 = vunpack.c.l.b16 %v1510
        %v1599 = vunpack.c.h.b16 %v1510
        %v1600 = vunpack.c.l.b16 %v1511
        %v1601 = vunpack.c.h.b16 %v1511
        %v1602 = vunpack.c.l.b16 %v1512
        %v1603 = vunpack.c.h.b16 %v1512
        %v1604 = vunpack.c.l.b16 %v1513
        %v1605 = vunpack.c.h.b16 %v1513
        %v1606 = vunpack.c.l.b16 %v1514
        %v1607 = vunpack.c.h.b16 %v1514
        %v1608 = vunpack.c.l.b16 %v1515
        %v1609 = vunpack.c.h.b16 %v1515
        %v1610 = vunpack.c.l.b16 %v1516
        %v1611 = vunpack.c.h.b16 %v1516
        %v1612 = vunpack.c.l.b16 %v1517
        %v1613 = vunpack.c.h.b16 %v1517
        %v1614 = vunpack.c.l.b16 %v1518
        %v1615 = vunpack.c.h.b16 %v1518
        %v1616 = vunpack.c.l.b16 %v1519
        %v1617 = vunpack.c.h.b16 %v1519
        %v1618 = vunpack.c.l.b16 %v1520
        %v1619 = vunpack.c.h.b16 %v1520
        %v1620 = vunpack.c.l.b16 %v1521
        %v1621 = vunpack.c.h.b16 %v1521
        %v1622 = vunpack.c.l.b16 %v1522
        %v1623 = vunpack.c.h.b16 %v1522
        %v1624 = vunpack.c.l.b16 %v1523
        %v1625 = vunpack.c.h.b16 %v1523
        %v1626 = vunpack.c.l.b16 %v1524
        %v1627 = vunpack.c.h.b16 %v1524
        %v1628 = vunpack.c.l.b16 %v1525
        %v1629 = vunpack.c.h.b16 %v1525
        %v1630 = vunpack.c.l.b16 %v1526
        %v1631 = vunpack.c.h.b16 %v1526
        %v1632 = vunpack.c.l.b16 %v1527
        %v1633 = vunpack.c.h.b16 %v1527
        %v1634 = vunpack.c.l.b16 %v1528
        %v1635 = vunpack.c.h.b16 %v1528
        %v1636 = vunpack.c.l.b16 %v1529
        %v1637 = vunpack.c.h.b16 %v1529
        %v1638 = vpack.c.b16 %v1576, %v1574
        %v1639 = vpack.c.b16 %v1577, %v1575
        %v1640 = vpack.c.b16 %v1580, %v1578
        %v1641 = vpack.c.b16 %v1581, %v1579
        %v1642 = vpack.c.b16 %v1584, %v1582
        %v1643 = vpack.c.b16 %v1585, %v1583
        %v1644 = vpack.c.b16 %v1588, %v1586
        %v1645 = vpack.c.b16 %v1589, %v1587
        %v1646 = vpack.c.b16 %v1592, %v1590
        %v1647 = vpack.c.b16 %v1593, %v1591
        %v1648 = vpack.c.b16 %v1596, %v1594
        %v1649 = vpack.c.b16 %v1597, %v1595
        %v1650 = vpack.c.b16 %v1600, %v1598
        %v1651 = vpack.c.b16 %v1601, %v1599
        %v1652 = vpack.c.b16 %v1604, %v1602
        %v1653 = vpack.c.b16 %v1605, %v1603
        %v1654 = vpack.c.b16 %v1608, %v1606
        %v1655 = vpack.c.b16 %v1609, %v1607
        %v1656 = vpack.c.b16 %v1612, %v1610
        %v1657 = vpack.c.b16 %v1613, %v1611
        %v1658 = vpack.c.b16 %v1616, %v1614
        %v1659 = vpack.c.b16 %v1617, %v1615
        %v1660 = vpack.c.b16 %v1620, %v1618
        %v1661 = vpack.c.b16 %v1621, %v1619
        %v1662 = vpack.c.b16 %v1624, %v1622
        %v1663 = vpack.c.b16 %v1625, %v1623
        %v1664 = vpack.c.b16 %v1628, %v1626
        %v1665 = vpack.c.b16 %v1629, %v1627
        %v1666 = vpack.c.b16 %v1632, %v1630
        %v1667 = vpack.c.b16 %v1633, %v1631
        %v1668 = vpack.c.b16 %v1636, %v1634
        %v1669 = vpack.c.b16 %v1637, %v1635
        %1702 = vmatprep.subr.bf16.mxu0 %v1653
        %1703 = vmatpush1.bf16.msra.mxu0 %v1652
        %1704 = vmatprep.subr.bf16.mxu0 %v1651
        %1705 = vmatpush1.bf16.msra.mxu0 %v1650
        %1706 = vmatprep.subr.bf16.mxu0 %v1649
        %1707 = vmatpush1.bf16.msra.mxu0 %v1648
        %1708 = vmatprep.subr.bf16.mxu0 %v1647
        %1709 = vmatpush1.bf16.msra.mxu0 %v1646
        %1710 = vmatprep.subr.bf16.mxu0 %v1645
        %1711 = vmatpush1.bf16.msra.mxu0 %v1644
        %1712 = vmatprep.subr.bf16.mxu0 %v1643
        %1713 = vmatpush1.bf16.msra.mxu0 %v1642
        %1714 = vmatprep.subr.bf16.mxu0 %v1641
        %1715 = vmatpush1.bf16.msra.mxu0 %v1640
        %1716 = vmatprep.subr.bf16.mxu0 %v1639
        %1717 = vmatpush1.bf16.msra.mxu0 %v1638
        %1718 = vmatprep.subr.bf16.mxu0 %v1669
        %1719 = vmatpush2.bf16.msra.mxu0 %v1668
        %1720 = vmatprep.subr.bf16.mxu0 %v1667
        %1721 = vmatpush2.bf16.msra.mxu0 %v1666
        %1722 = vmatprep.subr.bf16.mxu0 %v1665
        %1723 = vmatpush2.bf16.msra.mxu0 %v1664
        %1724 = vmatprep.subr.bf16.mxu0 %v1663
        %1725 = vmatpush2.bf16.msra.mxu0 %v1662
        %1726 = vmatprep.subr.bf16.mxu0 %v1661
        %1727 = vmatpush2.bf16.msra.mxu0 %v1660
        %1728 = vmatprep.subr.bf16.mxu0 %v1659
        %1729 = vmatpush2.bf16.msra.mxu0 %v1658
        %1730 = vmatprep.subr.bf16.mxu0 %v1657
        %1731 = vmatpush2.bf16.msra.mxu0 %v1656
        %1732 = vmatprep.subr.bf16.mxu0 %v1655
        %1733 = vmatpush2.bf16.msra.mxu0 %v1654
        %1734 = vmatprep.mubr.bf16.mxu0 %v1483
        %1735 = vmatmul.mubr.bf16.gmra.mxu0 %v1482
        %v1736 = vpop.f32.mrf.mxu0
        %v1737 = vadd.f32 %v1535, %v1736
        %v1738 = vpop.f32.mrf.mxu0
        %v1739 = vadd.f32 %v1539, %v1738
        %v1740 = vpop.f32.mrf.mxu0
        %v1741 = vadd.f32 %v1535, %v1740
        %v1742 = vpop.f32.mrf.mxu0
        %v1743 = vadd.f32 %v1539, %v1742
        %1744 = vmatprep.mubr.bf16.mxu0 %v1485
        %1745 = vmatmul.mubr.bf16.gmra.mxu0 %v1484
        %v1746 = vpop.f32.mrf.mxu0
        %v1747 = vadd.f32 %v1535, %v1746
        %v1748 = vpop.f32.mrf.mxu0
        %v1749 = vadd.f32 %v1539, %v1748
        %v1750 = vpop.f32.mrf.mxu0
        %v1751 = vadd.f32 %v1535, %v1750
        %v1752 = vpop.f32.mrf.mxu0
        %v1753 = vadd.f32 %v1539, %v1752
        %1754 = vmatprep.mubr.bf16.mxu0 %v1487
        %1755 = vmatmul.mubr.bf16.gmra.mxu0 %v1486
        %v1756 = vpop.f32.mrf.mxu0
        %v1757 = vadd.f32 %v1535, %v1756
        %v1758 = vpop.f32.mrf.mxu0
        %v1759 = vadd.f32 %v1539, %v1758
        %v1760 = vpop.f32.mrf.mxu0
        %v1761 = vadd.f32 %v1535, %v1760
        %v1762 = vpop.f32.mrf.mxu0
        %v1763 = vadd.f32 %v1539, %v1762
        %1764 = vmatprep.mubr.bf16.mxu0 %v1489
        %1765 = vmatmul.mubr.bf16.gmra.mxu0 %v1488
        %v1766 = vpop.f32.mrf.mxu0
        %v1767 = vadd.f32 %v1535, %v1766
        %v1768 = vpop.f32.mrf.mxu0
        %v1769 = vadd.f32 %v1539, %v1768
        %v1770 = vpop.f32.mrf.mxu0
        %v1771 = vadd.f32 %v1535, %v1770
        %v1772 = vpop.f32.mrf.mxu0
        %v1773 = vadd.f32 %v1539, %v1772
        %1774 = vmatprep.mubr.bf16.mxu0 %v1491
        %1775 = vmatmul.mubr.bf16.gmra.mxu0 %v1490
        %v1776 = vpop.f32.mrf.mxu0
        %v1777 = vadd.f32 %v1535, %v1776
        %v1778 = vpop.f32.mrf.mxu0
        %v1779 = vadd.f32 %v1539, %v1778
        %v1780 = vpop.f32.mrf.mxu0
        %v1781 = vadd.f32 %v1535, %v1780
        %v1782 = vpop.f32.mrf.mxu0
        %v1783 = vadd.f32 %v1539, %v1782
        %1784 = vmatprep.mubr.bf16.mxu0 %v1493
        %1785 = vmatmul.mubr.bf16.gmra.mxu0 %v1492
        %v1786 = vpop.f32.mrf.mxu0
        %v1787 = vadd.f32 %v1535, %v1786
        %v1788 = vpop.f32.mrf.mxu0
        %v1789 = vadd.f32 %v1539, %v1788
        %v1790 = vpop.f32.mrf.mxu0
        %v1791 = vadd.f32 %v1535, %v1790
        %v1792 = vpop.f32.mrf.mxu0
        %v1793 = vadd.f32 %v1539, %v1792
        %1794 = vmatprep.mubr.bf16.mxu0 %v1495
        %1795 = vmatmul.mubr.bf16.gmra.mxu0 %v1494
        %v1796 = vpop.f32.mrf.mxu0
        %v1797 = vadd.f32 %v1535, %v1796
        %v1798 = vpop.f32.mrf.mxu0
        %v1799 = vadd.f32 %v1539, %v1798
        %v1800 = vpop.f32.mrf.mxu0
        %v1801 = vadd.f32 %v1535, %v1800
        %v1802 = vpop.f32.mrf.mxu0
        %v1803 = vadd.f32 %v1539, %v1802
        %1804 = vmatprep.mubr.bf16.mxu0 %v1497
        %1805 = vmatmul.mubr.bf16.gmra.mxu0 %v1496
        %v1806 = vpop.f32.mrf.mxu0
        %v1807 = vadd.f32 %v1535, %v1806
        %v1808 = vpop.f32.mrf.mxu0
        %v1809 = vadd.f32 %v1539, %v1808
        %v1810 = vpop.f32.mrf.mxu0
        %v1811 = vadd.f32 %v1535, %v1810
        %v1812 = vpop.f32.mrf.mxu0
        %v1813 = vadd.f32 %v1539, %v1812
        %1814 = vdwg.mxu0
        %v1815 = vmul.f32 %v1737, 0.5
        %v1816 = vmul.f32 %v1739, 0.5
        %v1817 = vmul.f32 %v1741, 0.5
        %v1818 = vmul.f32 %v1743, 0.5
        %v1819 = vmul.f32 %v1747, 0.5
        %v1820 = vmul.f32 %v1749, 0.5
        %v1821 = vmul.f32 %v1751, 0.5
        %v1822 = vmul.f32 %v1753, 0.5
        %v1823 = vmul.f32 %v1757, 0.5
        %v1824 = vmul.f32 %v1759, 0.5
        %v1825 = vmul.f32 %v1761, 0.5
        %v1826 = vmul.f32 %v1763, 0.5
        %v1827 = vmul.f32 %v1767, 0.5
        %v1828 = vmul.f32 %v1769, 0.5
        %v1829 = vmul.f32 %v1771, 0.5
        %v1830 = vmul.f32 %v1773, 0.5
        %v1831 = vmul.f32 %v1777, 0.5
        %v1832 = vmul.f32 %v1779, 0.5
        %v1833 = vmul.f32 %v1781, 0.5
        %v1834 = vmul.f32 %v1783, 0.5
        %v1835 = vmul.f32 %v1787, 0.5
        %v1836 = vmul.f32 %v1789, 0.5
        %v1837 = vmul.f32 %v1791, 0.5
        %v1838 = vmul.f32 %v1793, 0.5
        %v1839 = vmul.f32 %v1797, 0.5
        %v1840 = vmul.f32 %v1799, 0.5
        %v1841 = vmul.f32 %v1801, 0.5
        %v1842 = vmul.f32 %v1803, 0.5
        %v1843 = vmul.f32 %v1807, 0.5
        %v1844 = vmul.f32 %v1809, 0.5
        %v1845 = vmul.f32 %v1811, 0.5
        %v1846 = vmul.f32 %v1813, 0.5
        %v1847 = vtanh.pop %v1815
        %v1848 = vtanh.pop %v1816
        %v1849 = vtanh.pop %v1817
        %v1850 = vtanh.pop %v1818
        %v1851 = vtanh.pop %v1819
        %v1852 = vtanh.pop %v1820
        %v1853 = vtanh.pop %v1821
        %v1854 = vtanh.pop %v1822
        %v1855 = vtanh.pop %v1823
        %v1856 = vtanh.pop %v1824
        %v1857 = vtanh.pop %v1825
        %v1858 = vtanh.pop %v1826
        %v1859 = vtanh.pop %v1827
        %v1860 = vtanh.pop %v1828
        %v1861 = vtanh.pop %v1829
        %v1862 = vtanh.pop %v1830
        %v1863 = vtanh.pop %v1831
        %v1864 = vtanh.pop %v1832
        %v1865 = vtanh.pop %v1833
        %v1866 = vtanh.pop %v1834
        %v1867 = vtanh.pop %v1835
        %v1868 = vtanh.pop %v1836
        %v1869 = vtanh.pop %v1837
        %v1870 = vtanh.pop %v1838
        %v1871 = vtanh.pop %v1839
        %v1872 = vtanh.pop %v1840
        %v1873 = vtanh.pop %v1841
        %v1874 = vtanh.pop %v1842
        %v1875 = vtanh.pop %v1843
        %v1876 = vtanh.pop %v1844
        %v1877 = vtanh.pop %v1845
        %v1878 = vtanh.pop %v1846
        %v1879 = vmul.f32 %v1847, 0.5
        %v1880 = vmul.f32 %v1848, 0.5
        %v1881 = vmul.f32 %v1849, 0.5
        %v1882 = vmul.f32 %v1850, 0.5
        %v1883 = vmul.f32 %v1851, 0.5
        %v1884 = vmul.f32 %v1852, 0.5
        %v1885 = vmul.f32 %v1853, 0.5
        %v1886 = vmul.f32 %v1854, 0.5
        %v1887 = vmul.f32 %v1855, 0.5
        %v1888 = vmul.f32 %v1856, 0.5
        %v1889 = vmul.f32 %v1857, 0.5
        %v1890 = vmul.f32 %v1858, 0.5
        %v1891 = vmul.f32 %v1859, 0.5
        %v1892 = vmul.f32 %v1860, 0.5
        %v1893 = vmul.f32 %v1861, 0.5
        %v1894 = vmul.f32 %v1862, 0.5
        %v1895 = vmul.f32 %v1863, 0.5
        %v1896 = vmul.f32 %v1864, 0.5
        %v1897 = vmul.f32 %v1865, 0.5
        %v1898 = vmul.f32 %v1866, 0.5
        %v1899 = vmul.f32 %v1867, 0.5
        %v1900 = vmul.f32 %v1868, 0.5
        %v1901 = vmul.f32 %v1869, 0.5
        %v1902 = vmul.f32 %v1870, 0.5
        %v1903 = vmul.f32 %v1871, 0.5
        %v1904 = vmul.f32 %v1872, 0.5
        %v1905 = vmul.f32 %v1873, 0.5
        %v1906 = vmul.f32 %v1874, 0.5
        %v1907 = vmul.f32 %v1875, 0.5
        %v1908 = vmul.f32 %v1876, 0.5
        %v1909 = vmul.f32 %v1877, 0.5
        %v1910 = vmul.f32 %v1878, 0.5
        %v1911 = vadd.f32 %v1879, 0.5
        %v1912 = vadd.f32 %v1880, 0.5
        %v1913 = vadd.f32 %v1881, 0.5
        %v1914 = vadd.f32 %v1882, 0.5
        %v1915 = vadd.f32 %v1883, 0.5
        %v1916 = vadd.f32 %v1884, 0.5
        %v1917 = vadd.f32 %v1885, 0.5
        %v1918 = vadd.f32 %v1886, 0.5
        %v1919 = vadd.f32 %v1887, 0.5
        %v1920 = vadd.f32 %v1888, 0.5
        %v1921 = vadd.f32 %v1889, 0.5
        %v1922 = vadd.f32 %v1890, 0.5
        %v1923 = vadd.f32 %v1891, 0.5
        %v1924 = vadd.f32 %v1892, 0.5
        %v1925 = vadd.f32 %v1893, 0.5
        %v1926 = vadd.f32 %v1894, 0.5
        %v1927 = vadd.f32 %v1895, 0.5
        %v1928 = vadd.f32 %v1896, 0.5
        %v1929 = vadd.f32 %v1897, 0.5
        %v1930 = vadd.f32 %v1898, 0.5
        %v1931 = vadd.f32 %v1899, 0.5
        %v1932 = vadd.f32 %v1900, 0.5
        %v1933 = vadd.f32 %v1901, 0.5
        %v1934 = vadd.f32 %v1902, 0.5
        %v1935 = vadd.f32 %v1903, 0.5
        %v1936 = vadd.f32 %v1904, 0.5
        %v1937 = vadd.f32 %v1905, 0.5
        %v1938 = vadd.f32 %v1906, 0.5
        %v1939 = vadd.f32 %v1907, 0.5
        %v1940 = vadd.f32 %v1908, 0.5
        %v1941 = vadd.f32 %v1909, 0.5
        %v1942 = vadd.f32 %v1910, 0.5
        %v1943 = vpack.c.bf16 %v1913, %v1911
        %v1944 = vpack.c.bf16 %v1914, %v1912
        %v1945 = vpack.c.bf16 %v1917, %v1915
        %v1946 = vpack.c.bf16 %v1918, %v1916
        %v1947 = vpack.c.bf16 %v1921, %v1919
        %v1948 = vpack.c.bf16 %v1922, %v1920
        %v1949 = vpack.c.bf16 %v1925, %v1923
        %v1950 = vpack.c.bf16 %v1926, %v1924
        %v1951 = vpack.c.bf16 %v1929, %v1927
        %v1952 = vpack.c.bf16 %v1930, %v1928
        %v1953 = vpack.c.bf16 %v1933, %v1931
        %v1954 = vpack.c.bf16 %v1934, %v1932
        %v1955 = vpack.c.bf16 %v1937, %v1935
        %v1956 = vpack.c.bf16 %v1938, %v1936
        %v1957 = vpack.c.bf16 %v1941, %v1939
        %v1958 = vpack.c.bf16 %v1942, %v1940
        %v1959 = vld [vmem:[#allocation8] sm:$0xf]
        %v1960 = vld [vmem:[#allocation8 + $0x4] sm:$0xf]
        %v1961 = vld [vmem:[#allocation8 + $0x8] sm:$0xf]
        %v1962 = vld [vmem:[#allocation8 + $0xc] sm:$0xf]
        %v1963 = vld [vmem:[#allocation8 + $0x10] sm:$0xf]
        %v1964 = vld [vmem:[#allocation8 + $0x14] sm:$0xf]
        %v1965 = vld [vmem:[#allocation8 + $0x18] sm:$0xf]
        %v1966 = vld [vmem:[#allocation8 + $0x1c] sm:$0xf]
        %v1967 = vld [vmem:[#allocation8 + $0x20] sm:$0xf]
        %v1968 = vld [vmem:[#allocation8 + $0x24] sm:$0xf]
        %v1969 = vld [vmem:[#allocation8 + $0x28] sm:$0xf]
        %v1970 = vld [vmem:[#allocation8 + $0x2c] sm:$0xf]
        %v1971 = vld [vmem:[#allocation8 + $0x30] sm:$0xf]
        %v1972 = vld [vmem:[#allocation8 + $0x34] sm:$0xf]
        %v1973 = vld [vmem:[#allocation8 + $0x38] sm:$0xf]
        %v1974 = vld [vmem:[#allocation8 + $0x3c] sm:$0xf]
        %v1975 = vld [vmem:[#allocation8 + $0x40] sm:$0xf]
        %v1976 = vld [vmem:[#allocation8 + $0x44] sm:$0xf]
        %v1977 = vld [vmem:[#allocation8 + $0x48] sm:$0xf]
        %v1978 = vld [vmem:[#allocation8 + $0x4c] sm:$0xf]
        %v1979 = vld [vmem:[#allocation8 + $0x50] sm:$0xf]
        %v1980 = vld [vmem:[#allocation8 + $0x54] sm:$0xf]
        %v1981 = vld [vmem:[#allocation8 + $0x58] sm:$0xf]
        %v1982 = vld [vmem:[#allocation8 + $0x5c] sm:$0xf]
        %v1983 = vld [vmem:[#allocation8 + $0x60] sm:$0xf]
        %v1984 = vld [vmem:[#allocation8 + $0x64] sm:$0xf]
        %v1985 = vld [vmem:[#allocation8 + $0x68] sm:$0xf]
        %v1986 = vld [vmem:[#allocation8 + $0x6c] sm:$0xf]
        %v1987 = vld [vmem:[#allocation8 + $0x70] sm:$0xf]
        %v1988 = vld [vmem:[#allocation8 + $0x74] sm:$0xf]
        %v1989 = vld [vmem:[#allocation8 + $0x78] sm:$0xf]
        %v1990 = vld [vmem:[#allocation8 + $0x7c] sm:$0xf]
        %v1991 = vld [vmem:[%s12] sm:$0x1]
        %v1993 = vlaneseq
        %v1994 = vshrl.u32 %v1993, 7
        %v1995 = vsub.s32 0, %v1994
        %v1996 = vrot.slane %v1991, %v1995
        %v2030 = vunpack.c.l.b16 %v1959
        %v2031 = vunpack.c.l.b16 %v1960
        %v2032 = vunpack.c.l.b16 %v1961
        %v2033 = vunpack.c.l.b16 %v1962
        %v2034 = vunpack.c.l.b16 %v1963
        %v2035 = vunpack.c.l.b16 %v1964
        %v2036 = vunpack.c.l.b16 %v1965
        %v2037 = vunpack.c.l.b16 %v1966
        %v2038 = vunpack.c.l.b16 %v1967
        %v2039 = vunpack.c.l.b16 %v1968
        %v2040 = vunpack.c.l.b16 %v1969
        %v2041 = vunpack.c.l.b16 %v1970
        %v2042 = vunpack.c.l.b16 %v1971
        %v2043 = vunpack.c.l.b16 %v1972
        %v2044 = vunpack.c.l.b16 %v1973
        %v2045 = vunpack.c.l.b16 %v1974
        %v2046 = vunpack.c.l.b16 %v1975
        %v2047 = vunpack.c.l.b16 %v1976
        %v2048 = vunpack.c.l.b16 %v1977
        %v2049 = vunpack.c.l.b16 %v1978
        %v2050 = vunpack.c.l.b16 %v1979
        %v2051 = vunpack.c.l.b16 %v1980
        %v2052 = vunpack.c.l.b16 %v1981
        %v2053 = vunpack.c.l.b16 %v1982
        %v2054 = vunpack.c.l.b16 %v1983
        %v2055 = vunpack.c.l.b16 %v1984
        %v2056 = vunpack.c.l.b16 %v1985
        %v2057 = vunpack.c.l.b16 %v1986
        %v2058 = vunpack.c.l.b16 %v1987
        %v2059 = vunpack.c.l.b16 %v1988
        %v2060 = vunpack.c.l.b16 %v1989
        %v2061 = vunpack.c.l.b16 %v1990
        %v2062 = vpack.c.b16 %v2031, %v2030
        %v2063 = vpack.c.b16 %v2033, %v2032
        %v2064 = vpack.c.b16 %v2035, %v2034
        %v2065 = vpack.c.b16 %v2037, %v2036
        %v2066 = vpack.c.b16 %v2039, %v2038
        %v2067 = vpack.c.b16 %v2041, %v2040
        %v2068 = vpack.c.b16 %v2043, %v2042
        %v2069 = vpack.c.b16 %v2045, %v2044
        %v2070 = vpack.c.b16 %v2047, %v2046
        %v2071 = vpack.c.b16 %v2049, %v2048
        %v2072 = vpack.c.b16 %v2051, %v2050
        %v2073 = vpack.c.b16 %v2053, %v2052
        %v2074 = vpack.c.b16 %v2055, %v2054
        %v2075 = vpack.c.b16 %v2057, %v2056
        %v2076 = vpack.c.b16 %v2059, %v2058
        %v2077 = vpack.c.b16 %v2061, %v2060
        %2094 = vmatprep.subr.bf16.mxu0 0
        %2095 = vmatpush1.bf16.msra.mxu0 %v2069
        %2096 = vmatprep.subr.bf16.mxu0 0
        %2097 = vmatpush1.bf16.msra.mxu0 %v2068
        %2098 = vmatprep.subr.bf16.mxu0 0
        %2099 = vmatpush1.bf16.msra.mxu0 %v2067
        %2100 = vmatprep.subr.bf16.mxu0 0
        %2101 = vmatpush1.bf16.msra.mxu0 %v2066
        %2102 = vmatprep.subr.bf16.mxu0 0
        %2103 = vmatpush1.bf16.msra.mxu0 %v2065
        %2104 = vmatprep.subr.bf16.mxu0 0
        %2105 = vmatpush1.bf16.msra.mxu0 %v2064
        %2106 = vmatprep.subr.bf16.mxu0 0
        %2107 = vmatpush1.bf16.msra.mxu0 %v2063
        %2108 = vmatprep.subr.bf16.mxu0 0
        %2109 = vmatpush1.bf16.msra.mxu0 %v2062
        %2110 = vmatprep.subr.bf16.mxu0 0
        %2111 = vmatpush2.bf16.msra.mxu0 %v2077
        %2112 = vmatprep.subr.bf16.mxu0 0
        %2113 = vmatpush2.bf16.msra.mxu0 %v2076
        %2114 = vmatprep.subr.bf16.mxu0 0
        %2115 = vmatpush2.bf16.msra.mxu0 %v2075
        %2116 = vmatprep.subr.bf16.mxu0 0
        %2117 = vmatpush2.bf16.msra.mxu0 %v2074
        %2118 = vmatprep.subr.bf16.mxu0 0
        %2119 = vmatpush2.bf16.msra.mxu0 %v2073
        %2120 = vmatprep.subr.bf16.mxu0 0
        %2121 = vmatpush2.bf16.msra.mxu0 %v2072
        %2122 = vmatprep.subr.bf16.mxu0 0
        %2123 = vmatpush2.bf16.msra.mxu0 %v2071
        %2124 = vmatprep.subr.bf16.mxu0 0
        %2125 = vmatpush2.bf16.msra.mxu0 %v2070
        %2126 = vmatprep.mubr.bf16.mxu0 %v1944
        %2127 = vmatmul.mubr.bf16.gmra.mxu0 %v1943
        %v2128 = vpop.f32.mrf.mxu0
        %v2129 = vadd.f32 %v1996, %v2128
        %v2130 = vpop.f32.mrf.mxu0
        %v2131 = vpop.f32.mrf.mxu0
        %v2132 = vadd.f32 %v1996, %v2131
        %v2133 = vpop.f32.mrf.mxu0
        %2134 = vmatprep.mubr.bf16.mxu0 %v1946
        %2135 = vmatmul.mubr.bf16.gmra.mxu0 %v1945
        %v2136 = vpop.f32.mrf.mxu0
        %v2137 = vadd.f32 %v1996, %v2136
        %v2138 = vpop.f32.mrf.mxu0
        %v2139 = vpop.f32.mrf.mxu0
        %v2140 = vadd.f32 %v1996, %v2139
        %v2141 = vpop.f32.mrf.mxu0
        %2142 = vmatprep.mubr.bf16.mxu0 %v1948
        %2143 = vmatmul.mubr.bf16.gmra.mxu0 %v1947
        %v2144 = vpop.f32.mrf.mxu0
        %v2145 = vadd.f32 %v1996, %v2144
        %v2146 = vpop.f32.mrf.mxu0
        %v2147 = vpop.f32.mrf.mxu0
        %v2148 = vadd.f32 %v1996, %v2147
        %v2149 = vpop.f32.mrf.mxu0
        %2150 = vmatprep.mubr.bf16.mxu0 %v1950
        %2151 = vmatmul.mubr.bf16.gmra.mxu0 %v1949
        %v2152 = vpop.f32.mrf.mxu0
        %v2153 = vadd.f32 %v1996, %v2152
        %v2154 = vpop.f32.mrf.mxu0
        %v2155 = vpop.f32.mrf.mxu0
        %v2156 = vadd.f32 %v1996, %v2155
        %v2157 = vpop.f32.mrf.mxu0
        %2158 = vmatprep.mubr.bf16.mxu0 %v1952
        %2159 = vmatmul.mubr.bf16.gmra.mxu0 %v1951
        %v2160 = vpop.f32.mrf.mxu0
        %v2161 = vadd.f32 %v1996, %v2160
        %v2162 = vpop.f32.mrf.mxu0
        %v2163 = vpop.f32.mrf.mxu0
        %v2164 = vadd.f32 %v1996, %v2163
        %v2165 = vpop.f32.mrf.mxu0
        %2166 = vmatprep.mubr.bf16.mxu0 %v1954
        %2167 = vmatmul.mubr.bf16.gmra.mxu0 %v1953
        %v2168 = vpop.f32.mrf.mxu0
        %v2169 = vadd.f32 %v1996, %v2168
        %v2170 = vpop.f32.mrf.mxu0
        %v2171 = vpop.f32.mrf.mxu0
        %v2172 = vadd.f32 %v1996, %v2171
        %v2173 = vpop.f32.mrf.mxu0
        %2174 = vmatprep.mubr.bf16.mxu0 %v1956
        %2175 = vmatmul.mubr.bf16.gmra.mxu0 %v1955
        %v2176 = vpop.f32.mrf.mxu0
        %v2177 = vadd.f32 %v1996, %v2176
        %v2178 = vpop.f32.mrf.mxu0
        %v2179 = vpop.f32.mrf.mxu0
        %v2180 = vadd.f32 %v1996, %v2179
        %v2181 = vpop.f32.mrf.mxu0
        %2182 = vmatprep.mubr.bf16.mxu0 %v1958
        %2183 = vmatmul.mubr.bf16.gmra.mxu0 %v1957
        %v2184 = vpop.f32.mrf.mxu0
        %v2185 = vadd.f32 %v1996, %v2184
        %v2186 = vpop.f32.mrf.mxu0
        %v2187 = vpop.f32.mrf.mxu0
        %v2188 = vadd.f32 %v1996, %v2187
        %v2189 = vpop.f32.mrf.mxu0
        %2190 = vdwg.mxu0
        %2191 = vxpose.xlu0.b32.start [1/16] %v2129, 128
        %2192 = vxpose.xlu0.b32.cont [2/16] %v2132, 128
        %2193 = vxpose.xlu0.b32.cont [3/16] %v2137, 128
        %2194 = vxpose.xlu0.b32.cont [4/16] %v2140, 128
        %2195 = vxpose.xlu0.b32.cont [5/16] %v2145, 128
        %2196 = vxpose.xlu0.b32.cont [6/16] %v2148, 128
        %2197 = vxpose.xlu0.b32.cont [7/16] %v2153, 128
        %2198 = vxpose.xlu0.b32.cont [8/16] %v2156, 128
        %2199 = vxpose.xlu0.b32.cont [9/16] %v2161, 128
        %2200 = vxpose.xlu0.b32.cont [10/16] %v2164, 128
        %2201 = vxpose.xlu0.b32.cont [11/16] %v2169, 128
        %2202 = vxpose.xlu0.b32.cont [12/16] %v2172, 128
        %2203 = vxpose.xlu0.b32.cont [13/16] %v2177, 128
        %2204 = vxpose.xlu0.b32.cont [14/16] %v2180, 128
        %2205 = vxpose.xlu0.b32.cont [15/16] %v2185, 128
        %2206 = vxpose.xlu0.b32.end [16/16] %v2188, 128
        %v2207 = vpop.trf.xlu0
        %v2208 = vpop.trf.xlu0
        %v2209 = vpop.trf.xlu0
        %v2210 = vpop.trf.xlu0
        %v2211 = vpop.trf.xlu0
        %v2212 = vpop.trf.xlu0
        %v2213 = vpop.trf.xlu0
        %v2214 = vpop.trf.xlu0
        %v2215 = vpop.trf.xlu0
        %v2216 = vpop.trf.xlu0
        %v2217 = vpop.trf.xlu0
        %v2218 = vpop.trf.xlu0
        %v2219 = vpop.trf.xlu0
        %v2220 = vpop.trf.xlu0
        %v2221 = vpop.trf.xlu0
        %v2222 = vpop.trf.xlu0
        %v2223 = vmul.f32 %v2207, 0.5
        %v2224 = vtanh.pop %v2223
        %v2225 = vmul.f32 %v2224, 0.5
        %v2226 = vadd.f32 %v2225, 0.5
        %2227 = vst [vmem:[%s492] sm:$0x1] %v2226
        %s2228 = sand.u32 %s316, 1
        %s2229 = scalar_lea.sflag [#allocation4], %s2228
        %s2230 = sand.u32 %s316, 1
        %s2231 = scalar_lea.vmem [#allocation10], %s2230
        // Predicated region
        $region89: #{tpu_custom_call.1} parent=71 // pred_check
          %p2232 = pneg %p326
        $region90: #{tpu_custom_call.1} parent=71 // pred_check_branch
          %2234 = sbr.rel (%p2232) target = $region92
        $region91: #{tpu_custom_call.1} parent=71 // pred_region
          %s2236 = ssub.s32 16, 16
          %2237 = vsyncadd %s2229, %s2236
          %s2238 = smul.addr %s30, 16
          %s2239 = scalar_lea.hbm %s13, %s2238
          %s2241 = sshll.u32 %s2231, 4
          %s2242 = int_to_ptr.vmem [resolvable:$true] %s2241
          %2244 = dma.vmem_to_hbm [thread:$0]  %s2242, 16, %s2239, %s2229
        $region92: #{tpu_custom_call.1} parent=71 // pred_fallthru
          _
      $region72: #{tpu_custom_call.1} parent=5 // pred_fallthru
        _
      %p2245 = scmp.le.s32.totalorder 2, %s25
      // Predicated region
      $region93: #{tpu_custom_call.1} parent=5 // pred_check
        %p2246 = pneg %p2245
      $region94: #{tpu_custom_call.1} parent=5 // pred_check_branch
        %2248 = sbr.rel (%p2246) target = $region96
      $region95: #{tpu_custom_call.1} parent=5 // pred_region
        %s2249 = ssub.s32 %s25, 2
        // Predicated region
        $region97: #{tpu_custom_call.1} parent=95 // pred_check
          %p2250 = pneg %p332
        $region98: #{tpu_custom_call.1} parent=95 // pred_check_branch
          %2252 = sbr.rel (%p2250) target = $region100
        $region99: #{tpu_custom_call.1} parent=95 // pred_region
          %s2253 = sand.u32 %s317, 1
          %s2254 = scalar_lea.sflag [#allocation4], %s2253
          %s2255 = sand.u32 %s317, 1
          %s2256 = scalar_lea.vmem [#allocation10], %s2255
          %2257 = dma.done %s2254, 16
        $region100: #{tpu_custom_call.1} parent=95 // pred_fallthru
          _
      $region96: #{tpu_custom_call.1} parent=5 // pred_fallthru
        _
    $region6: #{tpu_custom_call.1} parent=1 // loop_footer
      %s29 = sadd.s32 1, %s25
    $region7: #{tpu_custom_call.1} parent=1 // loop_footer_branch
      %24 = sbr.rel target = $region3
    $region8: #{tpu_custom_call.1} parent=1 // loop_exit
      _
    %2258 = vsyncpa [#allocation3], 1
    %s2259 = scalar_lea.sflag [#allocation3], 1
    %2260 = vsyncpa %s2259, 1
    %2261 = vsyncpa [#allocation6], 1
    %2262 = vsyncpa [#allocation9], 1
    %2263 = vsyncpa [#allocation4], 1
    %s2264 = scalar_lea.sflag [#allocation4], 1
    %2265 = vsyncpa %s2264, 1

</llo_original>
